<compile_context>
chip_gen: v5e
topology: v5e:2x2
jax: 0.10.0
libtpu: 0.0.40
codegen_flags: <defaults>
</compile_context>

<pallas_src>
import functools

import jax
import jax.numpy as jnp
from jax.experimental import pallas as pl
from jax.experimental.pallas import tpu as pltpu


MXU_DTYPE = jnp.bfloat16              # MXU input dtype (accumulation stays f32)
VMEM_LIMIT_BYTES = 32 * 1024 * 1024   # safe on v5e/v6e/v7x
VMEM_BLOCK_BUDGET = 4 * 1024 * 1024   # per-block budget (pipeline double-buffers)
TARGET_ROWS = 256                     # dense-matmul rows targeted per grid step


# ------------------------------------------------------------------ kernels --

def _aggregate_rows(self_ref, nbr_ref, rel_ref, user_ref, w_ref, b_ref, mxu_dtype):
    """Shared KGCN 'sum' aggregator body (pre-activation).

    self_ref [Bb, M, D], nbr_ref [Bb, M, N, D], rel_ref [Bb, M*N, D],
    user_ref [Bb, 1, D], w_ref [D, D], b_ref [1, D]  ->  [Bb, M, D] float32
    """
    Bb, M, N, D = nbr_ref.shape
    u = user_ref[...]                                            # [Bb, 1, D] (kept 2-D+)

    # user-relation attention scores: contraction over D done on the MXU
    scores = jnp.einsum(
        "bqd,bkd->bqk",
        rel_ref[...].astype(mxu_dtype), u.astype(mxu_dtype),
        preferred_element_type=jnp.float32)                      # [Bb, M*N, 1]
    scores = scores.reshape(Bb, M, N, 1)

    # softmax over the neighbor axis (f32 VPU/EUP math; max-subtracted)
    scores = scores - jnp.max(scores, axis=2, keepdims=True)
    e = jnp.exp(scores)
    probs = e / jnp.sum(e, axis=2, keepdims=True)                # [Bb, M, N, 1]

    # weighted neighbor sum: block-diagonal in M -> stays on the VPU
    neigh = jnp.sum(probs * nbr_ref[...], axis=2)                # [Bb, M, D]

    # 'sum' aggregator dense layer: all Bb*M rows through one MXU matmul
    mixed = (self_ref[...] + neigh).reshape(Bb * M, D)
    pre = jnp.dot(mixed.astype(mxu_dtype), w_ref[...].astype(mxu_dtype),
                  preferred_element_type=jnp.float32) + b_ref[...]
    return pre.reshape(Bb, M, D)                                 # f32


def _agg_kernel(self_ref, nbr_ref, rel_ref, user_ref, w_ref, b_ref, out_ref, *,
                mxu_dtype):
    """Non-final KGCN iteration (sigmoid activation, per the reference model)."""
    pre = _aggregate_rows(self_ref, nbr_ref, rel_ref, user_ref, w_ref, b_ref,
                          mxu_dtype)
    out_ref[...] = jax.nn.sigmoid(pre).astype(out_ref.dtype)


def _final_kernel(self_ref, nbr_ref, rel_ref, user_ref, w_ref, b_ref, score_ref, *,
                  mxu_dtype):
    """Final KGCN iteration (tanh) fused with the sigmoid(user . item) scoring."""
    pre = _aggregate_rows(self_ref, nbr_ref, rel_ref, user_ref, w_ref, b_ref,
                          mxu_dtype)                             # [Bb, 1, D]
    item = jnp.tanh(pre)                                         # [Bb, 1, D]
    s = jnp.sum(user_ref[...] * item, axis=-1, keepdims=True)    # [Bb, 1, 1]
    score_ref[...] = jax.nn.sigmoid(s)


# ----------------------------------------------------------------- wrappers --

def _choose_batch_block(B, M, N, D, itemsize=4):
    """Largest divisor of B whose (double-buffered) block fits the VMEM budget,
    stopping early once the MXU row target is reached (keeps several grid
    steps alive for megacore sharding at realistic batch sizes)."""
    best = 1
    for cand in range(1, B + 1):
        if B % cand:
            continue
        # self + out + nbr + rel + user per block (f32)
        blk_bytes = cand * (2 * M * D + 2 * M * N * D + D) * itemsize
        if 2 * blk_bytes > VMEM_BLOCK_BUDGET:        # pipeline double-buffers
            break
        best = cand
        if cand * M >= TARGET_ROWS:
            break
    return best


def _aggregate_call(self_vecs, nbr_vecs, rel_flat, user3, W, b2, *, final,
                    mxu_dtype):
    """One fused KGCN iteration.

    self_vecs [B, M, D], nbr_vecs [B, M, N, D], rel_flat [B, M*N, D],
    user3 [B, 1, D], W [D, D], b2 [1, D].
    Returns [B, M, D] (non-final) or [B] scores (final, M == 1).
    """
    B, M, D = self_vecs.shape
    N = nbr_vecs.shape[2]
    bblk = _choose_batch_block(B, M, N, D)
    grid = (B // bblk,)

    in_specs = [
        pl.BlockSpec((bblk, M, D), lambda i: (i, 0, 0)),
        pl.BlockSpec((bblk, M, N, D), lambda i: (i, 0, 0, 0)),
        pl.BlockSpec((bblk, M * N, D), lambda i: (i, 0, 0)),
        pl.BlockSpec((bblk, 1, D), lambda i: (i, 0, 0)),
        pl.BlockSpec((D, D), lambda i: (0, 0)),
        pl.BlockSpec((1, D), lambda i: (0, 0)),
    ]
    compiler_params = pltpu.CompilerParams(
        dimension_semantics=("parallel",),
        vmem_limit_bytes=VMEM_LIMIT_BYTES)

    if final:
        kernel = functools.partial(_final_kernel, mxu_dtype=mxu_dtype)
        out = pl.pallas_call(
            kernel,
            out_shape=jax.ShapeDtypeStruct((B, 1, 1), jnp.float32),
            grid=grid,
            in_specs=in_specs,
            out_specs=pl.BlockSpec((bblk, 1, 1), lambda i: (i, 0, 0)),
            compiler_params=compiler_params,
        )(self_vecs, nbr_vecs, rel_flat, user3, W, b2)
        return out.reshape(B)

    kernel = functools.partial(_agg_kernel, mxu_dtype=mxu_dtype)
    return pl.pallas_call(
        kernel,
        out_shape=jax.ShapeDtypeStruct((B, M, D), jnp.float32),
        grid=grid,
        in_specs=in_specs,
        out_specs=pl.BlockSpec((bblk, M, D), lambda i: (i, 0, 0)),
        compiler_params=compiler_params,
    )(self_vecs, nbr_vecs, rel_flat, user3, W, b2)


def kgcn_forward(u, v, params, adj_ent, adj_rel, *, n_iter, n_neighbor, dim,
                 mxu_dtype=MXU_DTYPE):
    """Full KGCN forward pass. u, v: int32 [B]. Returns sigmoid scores [B]."""
    B = u.shape[0]
    D = dim
    N = n_neighbor

    # ----- embedding lookups / neighbor index expansion (plain-JAX glue) ----
    # TODO(synk): gather ent/rel embedding rows in-kernel (scalar-prefetched
    # indices + data-dependent index_map or manual DMA) to avoid materializing
    # the [B, N**h, D] neighbor tensors in HBM and re-reading them.
    user_emb = params["usr"][u]                        # [B, D]
    entities = [v.reshape(B, 1)]
    relations = []
    for h in range(n_iter):
        idx = entities[h]                              # [B, N**h]
        entities.append(adj_ent[idx].reshape(B, -1))   # [B, N**(h+1)]
        relations.append(adj_rel[idx].reshape(B, -1))
    entity_vectors = [params["ent"][e] for e in entities]      # [B, N**h, D]
    relation_vectors = [params["rel"][r] for r in relations]   # [B, N**(h+1), D]

    user3 = user_emb.reshape(B, 1, D)
    W = params["W"]
    b2 = params["b"].reshape(1, D)

    # ----- iterative aggregation: one fused pallas_call per iteration -------
    for i in range(n_iter):
        n_hops = n_iter - i
        m_sizes = [N ** h for h in range(n_hops)]
        self_cat = jnp.concatenate(entity_vectors[:n_hops], axis=1)      # [B, Mtot, D]
        nbr_cat = jnp.concatenate(
            [entity_vectors[h + 1].reshape(B, m_sizes[h], N, D)
             for h in range(n_hops)], axis=1)                            # [B, Mtot, N, D]
        rel_flat = jnp.concatenate(relation_vectors[:n_hops], axis=1)    # [B, Mtot*N, D]

        if i == n_iter - 1:
            # final iteration: single hop (Mtot == 1); tanh + scoring fused
            return _aggregate_call(self_cat, nbr_cat, rel_flat, user3, W, b2,
                                   final=True, mxu_dtype=mxu_dtype)

        out_cat = _aggregate_call(self_cat, nbr_cat, rel_flat, user3, W, b2,
                                  final=False, mxu_dtype=mxu_dtype)      # [B, Mtot, D]
        # split fused output back into per-hop vectors for the next iteration
        new_vectors, off = [], 0
        for m in m_sizes:
            new_vectors.append(out_cat[:, off:off + m, :])
            off += m
        entity_vectors = new_vectors


# --------------------------------------------------------------------- main --

if __name__ == "__main__":
    # small, forward-consistent shapes
    NUM_USER, NUM_ENT, NUM_REL = 16, 32, 8
    DIM, N_NEIGHBOR, N_ITER, BATCH = 32, 4, 2, 4

    key = jax.random.PRNGKey(0)
    k_usr, k_ent, k_rel, k_w, k_b, k_ae, k_ar, k_u, k_v = jax.random.split(key, 9)

    params = {
        # nn.Embedding default init ~ N(0, 1)
        "usr": jax.random.normal(k_usr, (NUM_USER, DIM), jnp.float32),
        "ent": jax.random.normal(k_ent, (NUM_ENT, DIM), jnp.float32),
        "rel": jax.random.normal(k_rel, (NUM_REL, DIM), jnp.float32),
        # aggregator Linear(dim, dim) ('sum' aggregator)
        "W": jax.random.normal(k_w, (DIM, DIM), jnp.float32) / jnp.sqrt(DIM),
        "b": jax.random.normal(k_b, (DIM,), jnp.float32) / jnp.sqrt(DIM),
    }

    # synthetic KG adjacency (deterministic stand-in for _gen_adj sampling)
    adj_ent = jax.random.randint(k_ae, (NUM_ENT, N_NEIGHBOR), 0, NUM_ENT, jnp.int32)
    adj_rel = jax.random.randint(k_ar, (NUM_ENT, N_NEIGHBOR), 0, NUM_REL, jnp.int32)

    u = jax.random.randint(k_u, (BATCH,), 0, NUM_USER, jnp.int32)
    v = jax.random.randint(k_v, (BATCH,), 0, NUM_ENT, jnp.int32)

    fwd = jax.jit(functools.partial(
        kgcn_forward, n_iter=N_ITER, n_neighbor=N_NEIGHBOR, dim=DIM))
    scores = fwd(u, v, params, adj_ent, adj_rel)
    jax.block_until_ready(scores)

    assert scores.shape == (BATCH,)
    assert bool(jnp.all(jnp.isfinite(scores)))
    assert bool(jnp.all((scores >= 0.0) & (scores <= 1.0)))
    print("KERNEL_OK")
</pallas_src>

<mosaic_0001>
module attributes {stable_mosaic.version = 11 : i64} {
  func.func @_final_kernel(%arg0: i32, %arg1: memref<4x1x32xf32, #tpu.memory_space<vmem>>, %arg2: memref<4x1x4x32xf32, #tpu.memory_space<vmem>>, %arg3: memref<4x4x32xf32, #tpu.memory_space<vmem>>, %arg4: memref<4x1x32xf32, #tpu.memory_space<vmem>>, %arg5: memref<32x32xf32, #tpu.memory_space<vmem>>, %arg6: memref<1x32xf32, #tpu.memory_space<vmem>>, %arg7: memref<4x1x1xf32, #tpu.memory_space<vmem>>) attributes {dimension_semantics = [#tpu.dimension_semantics<parallel>], iteration_bounds = array<i64: 1>, scalar_prefetch = 0 : i64, scratch_operands = 0 : i64, tpu.core_type = #tpu.core_type<tc>, window_params = [{transform_indices = @transform_0, window_bounds = array<i64: 4, 1, 32>}, {transform_indices = @transform_1, window_bounds = array<i64: 4, 1, 4, 32>}, {transform_indices = @transform_2, window_bounds = array<i64: 4, 4, 32>}, {transform_indices = @transform_3, window_bounds = array<i64: 4, 1, 32>}, {pipeline_mode = #tpu.pipeline_mode<synchronous>, transform_indices = @transform_4, window_bounds = array<i64: 32, 32>}, {pipeline_mode = #tpu.pipeline_mode<synchronous>, transform_indices = @transform_5, window_bounds = array<i64: 1, 32>}, {transform_indices = @transform_6, window_bounds = array<i64: 4, 1, 1>}]} {
    %c0 = arith.constant 0 : index
    %c0_0 = arith.constant 0 : index
    %c0_1 = arith.constant 0 : index
    %0 = vector.load %arg4[%c0, %c0_0, %c0_1] : memref<4x1x32xf32, #tpu.memory_space<vmem>>, vector<4x1x32xf32>
    %c0_2 = arith.constant 0 : index
    %c0_3 = arith.constant 0 : index
    %c0_4 = arith.constant 0 : index
    %1 = vector.load %arg3[%c0_2, %c0_3, %c0_4] : memref<4x4x32xf32, #tpu.memory_space<vmem>>, vector<4x4x32xf32>
    %2 = arith.truncf %1 : vector<4x4x32xf32> to vector<4x4x32xbf16>
    %3 = arith.truncf %0 : vector<4x1x32xf32> to vector<4x1x32xbf16>
    "tpu.trace_start"() <{level = 10 : i32, message = "bqd,bkd->bqk"}> : () -> ()
    %cst = arith.constant dense<0.000000e+00> : vector<4x4x1xf32>
    %4 = tpu.matmul %2, %3, %cst {dimension_numbers = #tpu.dot_dimension_numbers<[2], [2], [1], [1], [0, 0, 0, 1, 1, 1], [0], [0]>} : vector<4x4x32xbf16>, vector<4x1x32xbf16>, vector<4x4x1xf32> -> vector<4x4x1xf32>
    "tpu.trace_stop"() : () -> ()
    %5 = vector.shape_cast %4 : vector<4x4x1xf32> to vector<4x1x4x1xf32>
    %cst_5 = arith.constant dense<0xFF800000> : vector<4x1x1xf32>
    %6 = vector.multi_reduction <maximumf>, %5, %cst_5 [2] : vector<4x1x4x1xf32> to vector<4x1x1xf32>
    %7 = vector.shape_cast %6 : vector<4x1x1xf32> to vector<4x1x1x1xf32>
    %8 = vector.broadcast %7 : vector<4x1x1x1xf32> to vector<4x1x4x1xf32>
    %9 = arith.subf %5, %8 : vector<4x1x4x1xf32>
    %10 = math.exp %9 : vector<4x1x4x1xf32>
    %cst_6 = arith.constant dense<0.000000e+00> : vector<4x1x1xf32>
    %11 = vector.multi_reduction <add>, %10, %cst_6 [2] : vector<4x1x4x1xf32> to vector<4x1x1xf32>
    %12 = vector.shape_cast %11 : vector<4x1x1xf32> to vector<4x1x1x1xf32>
    %13 = vector.broadcast %12 : vector<4x1x1x1xf32> to vector<4x1x4x1xf32>
    %14 = arith.divf %10, %13 : vector<4x1x4x1xf32>
    %c0_7 = arith.constant 0 : index
    %c0_8 = arith.constant 0 : index
    %c0_9 = arith.constant 0 : index
    %c0_10 = arith.constant 0 : index
    %15 = vector.load %arg2[%c0_7, %c0_8, %c0_9, %c0_10] : memref<4x1x4x32xf32, #tpu.memory_space<vmem>>, vector<4x1x4x32xf32>
    %16 = vector.broadcast %14 : vector<4x1x4x1xf32> to vector<4x1x4x32xf32>
    %17 = arith.mulf %16, %15 : vector<4x1x4x32xf32>
    %cst_11 = arith.constant dense<0.000000e+00> : vector<4x1x32xf32>
    %18 = vector.multi_reduction <add>, %17, %cst_11 [2] : vector<4x1x4x32xf32> to vector<4x1x32xf32>
    %c0_12 = arith.constant 0 : index
    %c0_13 = arith.constant 0 : index
    %c0_14 = arith.constant 0 : index
    %19 = vector.load %arg1[%c0_12, %c0_13, %c0_14] : memref<4x1x32xf32, #tpu.memory_space<vmem>>, vector<4x1x32xf32>
    %20 = arith.addf %19, %18 : vector<4x1x32xf32>
    %21 = vector.shape_cast %20 : vector<4x1x32xf32> to vector<4x32xf32>
    %22 = arith.truncf %21 : vector<4x32xf32> to vector<4x32xbf16>
    %c0_15 = arith.constant 0 : index
    %c0_16 = arith.constant 0 : index
    %23 = vector.load %arg5[%c0_15, %c0_16] : memref<32x32xf32, #tpu.memory_space<vmem>>, vector<32x32xf32>
    %24 = arith.truncf %23 : vector<32x32xf32> to vector<32x32xbf16>
    %cst_17 = arith.constant dense<0.000000e+00> : vector<4x32xf32>
    %25 = tpu.matmul %22, %24, %cst_17 {dimension_numbers = #tpu.dot_dimension_numbers<[1], [0], [0], [1], [0, 0, 1, 1], [], []>} : vector<4x32xbf16>, vector<32x32xbf16>, vector<4x32xf32> -> vector<4x32xf32>
    %c0_18 = arith.constant 0 : index
    %c0_19 = arith.constant 0 : index
    %26 = vector.load %arg6[%c0_18, %c0_19] : memref<1x32xf32, #tpu.memory_space<vmem>>, vector<1x32xf32>
    %27 = vector.broadcast %26 : vector<1x32xf32> to vector<4x32xf32>
    %28 = arith.addf %25, %27 : vector<4x32xf32>
    %29 = vector.shape_cast %28 : vector<4x32xf32> to vector<4x1x32xf32>
    %30 = math.tanh %29 : vector<4x1x32xf32>
    %c0_20 = arith.constant 0 : index
    %c0_21 = arith.constant 0 : index
    %c0_22 = arith.constant 0 : index
    %31 = vector.load %arg4[%c0_20, %c0_21, %c0_22] : memref<4x1x32xf32, #tpu.memory_space<vmem>>, vector<4x1x32xf32>
    %32 = arith.mulf %31, %30 : vector<4x1x32xf32>
    %cst_23 = arith.constant dense<0.000000e+00> : vector<4x1xf32>
    %33 = vector.multi_reduction <add>, %32, %cst_23 [2] : vector<4x1x32xf32> to vector<4x1xf32>
    %34 = vector.shape_cast %33 : vector<4x1xf32> to vector<4x1x1xf32>
    %35 = arith.negf %34 : vector<4x1x1xf32>
    %36 = math.exp %35 : vector<4x1x1xf32>
    %cst_24 = arith.constant 1.000000e+00 : f32
    %37 = vector.broadcast %cst_24 : f32 to vector<4x1x1xf32>
    %38 = arith.addf %37, %36 : vector<4x1x1xf32>
    %39 = arith.divf %37, %38 : vector<4x1x1xf32>
    %c0_25 = arith.constant 0 : index
    %c0_26 = arith.constant 0 : index
    %c0_27 = arith.constant 0 : index
    %40 = vector.load %arg7[%c0_25, %c0_26, %c0_27] : memref<4x1x1xf32, #tpu.memory_space<vmem>>, vector<4x1x1xf32>
    tpu.vector_store %arg7[%c0_25, %c0_26, %c0_27], %39 {strides = array<i32>} : memref<4x1x1xf32, #tpu.memory_space<vmem>>, vector<4x1x1xf32>,
    return
  }
  func.func @transform_0(%arg0: i32) -> (i32, i32, i32) {
    %c0_i32 = arith.constant 0 : i32
    %c0_i32_0 = arith.constant 0 : i32
    %c0_i32_1 = arith.constant 0 : i32
    return %arg0, %c0_i32, %c0_i32_0 : i32, i32, i32
  }
  func.func @transform_1(%arg0: i32) -> (i32, i32, i32, i32) {
    %c0_i32 = arith.constant 0 : i32
    %c0_i32_0 = arith.constant 0 : i32
    %c0_i32_1 = arith.constant 0 : i32
    %c0_i32_2 = arith.constant 0 : i32
    return %arg0, %c0_i32, %c0_i32_0, %c0_i32_1 : i32, i32, i32, i32
  }
  func.func @transform_2(%arg0: i32) -> (i32, i32, i32) {
    %c0_i32 = arith.constant 0 : i32
    %c0_i32_0 = arith.constant 0 : i32
    %c0_i32_1 = arith.constant 0 : i32
    return %arg0, %c0_i32, %c0_i32_0 : i32, i32, i32
  }
  func.func @transform_3(%arg0: i32) -> (i32, i32, i32) {
    %c0_i32 = arith.constant 0 : i32
    %c0_i32_0 = arith.constant 0 : i32
    %c0_i32_1 = arith.constant 0 : i32
    return %arg0, %c0_i32, %c0_i32_0 : i32, i32, i32
  }
  func.func @transform_4(%arg0: i32) -> (i32, i32) {
    %c0_i32 = arith.constant 0 : i32
    %c0_i32_0 = arith.constant 0 : i32
    %c0_i32_1 = arith.constant 0 : i32
    return %c0_i32, %c0_i32_0 : i32, i32
  }
  func.func @transform_5(%arg0: i32) -> (i32, i32) {
    %c0_i32 = arith.constant 0 : i32
    %c0_i32_0 = arith.constant 0 : i32
    %c0_i32_1 = arith.constant 0 : i32
    return %c0_i32, %c0_i32_0 : i32, i32
  }
  func.func @transform_6(%arg0: i32) -> (i32, i32, i32) {
    %c0_i32 = arith.constant 0 : i32
    %c0_i32_0 = arith.constant 0 : i32
    %c0_i32_1 = arith.constant 0 : i32
    return %arg0, %c0_i32, %c0_i32_0 : i32, i32, i32
  }
}

module attributes {stable_mosaic.version = 11 : i64} {
  func.func @_agg_kernel(%arg0: i32, %arg1: memref<4x5x32xf32, #tpu.memory_space<vmem>>, %arg2: memref<4x5x4x32xf32, #tpu.memory_space<vmem>>, %arg3: memref<4x20x32xf32, #tpu.memory_space<vmem>>, %arg4: memref<4x1x32xf32, #tpu.memory_space<vmem>>, %arg5: memref<32x32xf32, #tpu.memory_space<vmem>>, %arg6: memref<1x32xf32, #tpu.memory_space<vmem>>, %arg7: memref<4x5x32xf32, #tpu.memory_space<vmem>>) attributes {dimension_semantics = [#tpu.dimension_semantics<parallel>], iteration_bounds = array<i64: 1>, scalar_prefetch = 0 : i64, scratch_operands = 0 : i64, tpu.core_type = #tpu.core_type<tc>, window_params = [{transform_indices = @transform_0, window_bounds = array<i64: 4, 5, 32>}, {transform_indices = @transform_1, window_bounds = array<i64: 4, 5, 4, 32>}, {transform_indices = @transform_2, window_bounds = array<i64: 4, 20, 32>}, {transform_indices = @transform_3, window_bounds = array<i64: 4, 1, 32>}, {pipeline_mode = #tpu.pipeline_mode<synchronous>, transform_indices = @transform_4, window_bounds = array<i64: 32, 32>}, {pipeline_mode = #tpu.pipeline_mode<synchronous>, transform_indices = @transform_5, window_bounds = array<i64: 1, 32>}, {transform_indices = @transform_6, window_bounds = array<i64: 4, 5, 32>}]} {
    %c0 = arith.constant 0 : index
    %c0_0 = arith.constant 0 : index
    %c0_1 = arith.constant 0 : index
    %0 = vector.load %arg4[%c0, %c0_0, %c0_1] : memref<4x1x32xf32, #tpu.memory_space<vmem>>, vector<4x1x32xf32>
    %c0_2 = arith.constant 0 : index
    %c0_3 = arith.constant 0 : index
    %c0_4 = arith.constant 0 : index
    %1 = vector.load %arg3[%c0_2, %c0_3, %c0_4] : memref<4x20x32xf32, #tpu.memory_space<vmem>>, vector<4x20x32xf32>
    %2 = arith.truncf %1 : vector<4x20x32xf32> to vector<4x20x32xbf16>
    %3 = arith.truncf %0 : vector<4x1x32xf32> to vector<4x1x32xbf16>
    "tpu.trace_start"() <{level = 10 : i32, message = "bqd,bkd->bqk"}> : () -> ()
    %cst = arith.constant dense<0.000000e+00> : vector<4x20x1xf32>
    %4 = tpu.matmul %2, %3, %cst {dimension_numbers = #tpu.dot_dimension_numbers<[2], [2], [1], [1], [0, 0, 0, 1, 1, 1], [0], [0]>} : vector<4x20x32xbf16>, vector<4x1x32xbf16>, vector<4x20x1xf32> -> vector<4x20x1xf32>
    "tpu.trace_stop"() : () -> ()
    %5 = vector.shape_cast %4 : vector<4x20x1xf32> to vector<4x5x4x1xf32>
    %cst_5 = arith.constant dense<0xFF800000> : vector<4x5x1xf32>
    %6 = vector.multi_reduction <maximumf>, %5, %cst_5 [2] : vector<4x5x4x1xf32> to vector<4x5x1xf32>
    %7 = vector.shape_cast %6 : vector<4x5x1xf32> to vector<4x5x1x1xf32>
    %8 = vector.broadcast %7 : vector<4x5x1x1xf32> to vector<4x5x4x1xf32>
    %9 = arith.subf %5, %8 : vector<4x5x4x1xf32>
    %10 = math.exp %9 : vector<4x5x4x1xf32>
    %cst_6 = arith.constant dense<0.000000e+00> : vector<4x5x1xf32>
    %11 = vector.multi_reduction <add>, %10, %cst_6 [2] : vector<4x5x4x1xf32> to vector<4x5x1xf32>
    %12 = vector.shape_cast %11 : vector<4x5x1xf32> to vector<4x5x1x1xf32>
    %13 = vector.broadcast %12 : vector<4x5x1x1xf32> to vector<4x5x4x1xf32>
    %14 = arith.divf %10, %13 : vector<4x5x4x1xf32>
    %c0_7 = arith.constant 0 : index
    %c0_8 = arith.constant 0 : index
    %c0_9 = arith.constant 0 : index
    %c0_10 = arith.constant 0 : index
    %15 = vector.load %arg2[%c0_7, %c0_8, %c0_9, %c0_10] : memref<4x5x4x32xf32, #tpu.memory_space<vmem>>, vector<4x5x4x32xf32>
    %16 = vector.broadcast %14 : vector<4x5x4x1xf32> to vector<4x5x4x32xf32>
    %17 = arith.mulf %16, %15 : vector<4x5x4x32xf32>
    %cst_11 = arith.constant dense<0.000000e+00> : vector<4x5x32xf32>
    %18 = vector.multi_reduction <add>, %17, %cst_11 [2] : vector<4x5x4x32xf32> to vector<4x5x32xf32>
    %c0_12 = arith.constant 0 : index
    %c0_13 = arith.constant 0 : index
    %c0_14 = arith.constant 0 : index
    %19 = vector.load %arg1[%c0_12, %c0_13, %c0_14] : memref<4x5x32xf32, #tpu.memory_space<vmem>>, vector<4x5x32xf32>
    %20 = arith.addf %19, %18 : vector<4x5x32xf32>
    %21 = vector.shape_cast %20 : vector<4x5x32xf32> to vector<20x32xf32>
    %22 = arith.truncf %21 : vector<20x32xf32> to vector<20x32xbf16>
    %c0_15 = arith.constant 0 : index
    %c0_16 = arith.constant 0 : index
    %23 = vector.load %arg5[%c0_15, %c0_16] : memref<32x32xf32, #tpu.memory_space<vmem>>, vector<32x32xf32>
    %24 = arith.truncf %23 : vector<32x32xf32> to vector<32x32xbf16>
    %cst_17 = arith.constant dense<0.000000e+00> : vector<20x32xf32>
    %25 = tpu.matmul %22, %24, %cst_17 {dimension_numbers = #tpu.dot_dimension_numbers<[1], [0], [0], [1], [0, 0, 1, 1], [], []>} : vector<20x32xbf16>, vector<32x32xbf16>, vector<20x32xf32> -> vector<20x32xf32>
    %c0_18 = arith.constant 0 : index
    %c0_19 = arith.constant 0 : index
    %26 = vector.load %arg6[%c0_18, %c0_19] : memref<1x32xf32, #tpu.memory_space<vmem>>, vector<1x32xf32>
    %27 = vector.broadcast %26 : vector<1x32xf32> to vector<20x32xf32>
    %28 = arith.addf %25, %27 : vector<20x32xf32>
    %29 = vector.shape_cast %28 : vector<20x32xf32> to vector<4x5x32xf32>
    %30 = arith.negf %29 : vector<4x5x32xf32>
    %31 = math.exp %30 : vector<4x5x32xf32>
    %cst_20 = arith.constant 1.000000e+00 : f32
    %32 = vector.broadcast %cst_20 : f32 to vector<4x5x32xf32>
    %33 = arith.addf %32, %31 : vector<4x5x32xf32>
    %34 = arith.divf %32, %33 : vector<4x5x32xf32>
    %c0_21 = arith.constant 0 : index
    %c0_22 = arith.constant 0 : index
    %c0_23 = arith.constant 0 : index
    %35 = vector.load %arg7[%c0_21, %c0_22, %c0_23] : memref<4x5x32xf32, #tpu.memory_space<vmem>>, vector<4x5x32xf32>
    tpu.vector_store %arg7[%c0_21, %c0_22, %c0_23], %34 {strides = array<i32>} : memref<4x5x32xf32, #tpu.memory_space<vmem>>, vector<4x5x32xf32>,
    return
  }
  func.func @transform_0(%arg0: i32) -> (i32, i32, i32) {
    %c0_i32 = arith.constant 0 : i32
    %c0_i32_0 = arith.constant 0 : i32
    %c0_i32_1 = arith.constant 0 : i32
    return %arg0, %c0_i32, %c0_i32_0 : i32, i32, i32
  }
  func.func @transform_1(%arg0: i32) -> (i32, i32, i32, i32) {
    %c0_i32 = arith.constant 0 : i32
    %c0_i32_0 = arith.constant 0 : i32
    %c0_i32_1 = arith.constant 0 : i32
    %c0_i32_2 = arith.constant 0 : i32
    return %arg0, %c0_i32, %c0_i32_0, %c0_i32_1 : i32, i32, i32, i32
  }
  func.func @transform_2(%arg0: i32) -> (i32, i32, i32) {
    %c0_i32 = arith.constant 0 : i32
    %c0_i32_0 = arith.constant 0 : i32
    %c0_i32_1 = arith.constant 0 : i32
    return %arg0, %c0_i32, %c0_i32_0 : i32, i32, i32
  }
  func.func @transform_3(%arg0: i32) -> (i32, i32, i32) {
    %c0_i32 = arith.constant 0 : i32
    %c0_i32_0 = arith.constant 0 : i32
    %c0_i32_1 = arith.constant 0 : i32
    return %arg0, %c0_i32, %c0_i32_0 : i32, i32, i32
  }
  func.func @transform_4(%arg0: i32) -> (i32, i32) {
    %c0_i32 = arith.constant 0 : i32
    %c0_i32_0 = arith.constant 0 : i32
    %c0_i32_1 = arith.constant 0 : i32
    return %c0_i32, %c0_i32_0 : i32, i32
  }
  func.func @transform_5(%arg0: i32) -> (i32, i32) {
    %c0_i32 = arith.constant 0 : i32
    %c0_i32_0 = arith.constant 0 : i32
    %c0_i32_1 = arith.constant 0 : i32
    return %c0_i32, %c0_i32_0 : i32, i32
  }
  func.func @transform_6(%arg0: i32) -> (i32, i32, i32) {
    %c0_i32 = arith.constant 0 : i32
    %c0_i32_0 = arith.constant 0 : i32
    %c0_i32_1 = arith.constant 0 : i32
    return %arg0, %c0_i32, %c0_i32_0 : i32, i32, i32
  }
}

</mosaic_0001>

<llo_original>
// kernel: kgcn_forward.3
$region0: #{kgcn_forward.3}
  #allocation0 [shape = 'u32[]', space=smem, size = 0x4, offset = 0x4, fixed_abs, tag = 'smem constant byte address 0x4 - core index']
  #allocation1 [shape = 'u32[72,128]{1,0:T(1,128)}', space=vmem, size = 0x9000, scoped, tag = 'internal scratch']
  %s0 = inlined_call_operand.vmem [shape: f32[4,1,32], index: 0, kind: input, shape index: {}]
  %s1 = inlined_call_operand.vmem [shape: f32[4,1,4,32], index: 1, kind: input, shape index: {}]
  %s2 = inlined_call_operand.vmem [shape: f32[4,4,32], index: 2, kind: input, shape index: {}]
  %s3 = inlined_call_operand.vmem [shape: f32[4,1,32], index: 3, kind: input, shape index: {}]
  %s4 = inlined_call_operand.vmem [shape: f32[32,32], index: 4, kind: input, shape index: {}]
  %s5 = inlined_call_operand.vmem [shape: f32[1,32], index: 5, kind: input, shape index: {}]
  %s6 = inlined_call_operand.vmem [shape: f32[4,1,1], index: 6, kind: output, shape index: {}]
  %s7 = sld [smem:[#allocation0]]
  $region34: #{kgcn_forward.3} parent=0
    _
  %s9 = ssub.s32 1, %s7
  %s10 = scalar_select 0, %s9, %s7
  // Predicated region
  $region2: #{kgcn_forward.3} parent=0 // pred_check
    _
  $region3: #{kgcn_forward.3} parent=0 // pred_check_branch
    %12 = sbr.rel (0) target = $region5
  $region4: #{kgcn_forward.3} parent=0 // pred_region
    _
  $region5: #{kgcn_forward.3} parent=0 // pred_fallthru
    _
  // Predicated region
  $region6: #{kgcn_forward.3} parent=0 // pred_check
    _
  $region7: #{kgcn_forward.3} parent=0 // pred_check_branch
    %14 = sbr.rel (0) target = $region9
  $region8: #{kgcn_forward.3} parent=0 // pred_region
    _
  $region9: #{kgcn_forward.3} parent=0 // pred_fallthru
    _
  // Predicated region
  $region10: #{kgcn_forward.3} parent=0 // pred_check
    _
  $region11: #{kgcn_forward.3} parent=0 // pred_check_branch
    %16 = sbr.rel (0) target = $region13
  $region12: #{kgcn_forward.3} parent=0 // pred_region
    _
  $region13: #{kgcn_forward.3} parent=0 // pred_fallthru
    _
  // Predicated region
  $region14: #{kgcn_forward.3} parent=0 // pred_check
    _
  $region15: #{kgcn_forward.3} parent=0 // pred_check_branch
    %18 = sbr.rel (0) target = $region17
  $region16: #{kgcn_forward.3} parent=0 // pred_region
    _
  $region17: #{kgcn_forward.3} parent=0 // pred_fallthru
    _
  // Predicated region
  $region18: #{kgcn_forward.3} parent=0 // pred_check
    _
  $region19: #{kgcn_forward.3} parent=0 // pred_check_branch
    %20 = sbr.rel (0) target = $region21
  $region20: #{kgcn_forward.3} parent=0 // pred_region
    _
  $region21: #{kgcn_forward.3} parent=0 // pred_fallthru
    _
  // Predicated region
  $region22: #{kgcn_forward.3} parent=0 // pred_check
    _
  $region23: #{kgcn_forward.3} parent=0 // pred_check_branch
    %22 = sbr.rel (0) target = $region25
  $region24: #{kgcn_forward.3} parent=0 // pred_region
    _
  $region25: #{kgcn_forward.3} parent=0 // pred_fallthru
    _
  %v24 = vld [vmem:[%s3] sm:$0x1]
  %v25 = vld [vmem:[%s3 + $0x1] sm:$0x1]
  %v26 = vld [vmem:[%s3 + $0x2] sm:$0x1]
  %v27 = vld [vmem:[%s3 + $0x3] sm:$0x1]
  %v28 = vld [vmem:[%s2] sm:$0xf]
  %v29 = vld [vmem:[%s2 + $0x4] sm:$0xf]
  %v30 = vld [vmem:[%s2 + $0x8] sm:$0xf]
  %v31 = vld [vmem:[%s2 + $0xc] sm:$0xf]
  %v32 = vpack.c.bf16 %v28, %v28
  %v33 = vpack.c.bf16 %v29, %v29
  %v34 = vpack.c.bf16 %v30, %v30
  %v35 = vpack.c.bf16 %v31, %v31
  %v36 = vpack.c.bf16 %v24, %v24
  %v37 = vpack.c.bf16 %v25, %v25
  %v38 = vpack.c.bf16 %v26, %v26
  %v39 = vpack.c.bf16 %v27, %v27
  %vm40 = vcmask 261120
  %v42 = vsel %vm40, %v32, 0
  %v45 = vsel %vm40, %v36, 0
  %47 = vmatpush.bf16.xpose.msra.mxu0 0
  %48 = vmatpush.bf16.xpose.msra.mxu0 0
  %49 = vmatpush.bf16.xpose.msra.mxu0 0
  %50 = vmatpush.bf16.xpose.msra.mxu0 0
  %51 = vmatpush.bf16.xpose.msra.mxu0 0
  %52 = vmatpush.bf16.xpose.msra.mxu0 0
  %53 = vmatpush.bf16.xpose.msra.mxu0 0
  %54 = vmatpush.bf16.xpose.msra.mxu0 %v45
  %55 = vmatmul.bf16.gmra.mxu0 %v42
  %v56 = vpop.f32.mrf.mxu0
  %v57 = vadd.f32 0.0, %v56
  %v58 = vpop.f32.mrf.mxu0
  %59 = vdwg.mxu0
  %v61 = vsel %vm40, %v33, 0
  %v64 = vsel %vm40, %v37, 0
  %66 = vmatpush.bf16.xpose.msra.mxu0 0
  %67 = vmatpush.bf16.xpose.msra.mxu0 0
  %68 = vmatpush.bf16.xpose.msra.mxu0 0
  %69 = vmatpush.bf16.xpose.msra.mxu0 0
  %70 = vmatpush.bf16.xpose.msra.mxu0 0
  %71 = vmatpush.bf16.xpose.msra.mxu0 0
  %72 = vmatpush.bf16.xpose.msra.mxu0 0
  %73 = vmatpush.bf16.xpose.msra.mxu0 %v64
  %74 = vmatmul.bf16.gmra.mxu0 %v61
  %v75 = vpop.f32.mrf.mxu0
  %v76 = vadd.f32 0.0, %v75
  %v77 = vpop.f32.mrf.mxu0
  %78 = vdwg.mxu0
  %v80 = vsel %vm40, %v34, 0
  %v83 = vsel %vm40, %v38, 0
  %85 = vmatpush.bf16.xpose.msra.mxu0 0
  %86 = vmatpush.bf16.xpose.msra.mxu0 0
  %87 = vmatpush.bf16.xpose.msra.mxu0 0
  %88 = vmatpush.bf16.xpose.msra.mxu0 0
  %89 = vmatpush.bf16.xpose.msra.mxu0 0
  %90 = vmatpush.bf16.xpose.msra.mxu0 0
  %91 = vmatpush.bf16.xpose.msra.mxu0 0
  %92 = vmatpush.bf16.xpose.msra.mxu0 %v83
  %93 = vmatmul.bf16.gmra.mxu0 %v80
  %v94 = vpop.f32.mrf.mxu0
  %v95 = vadd.f32 0.0, %v94
  %v96 = vpop.f32.mrf.mxu0
  %97 = vdwg.mxu0
  %v99 = vsel %vm40, %v35, 0
  %v102 = vsel %vm40, %v39, 0
  %104 = vmatpush.bf16.xpose.msra.mxu0 0
  %105 = vmatpush.bf16.xpose.msra.mxu0 0
  %106 = vmatpush.bf16.xpose.msra.mxu0 0
  %107 = vmatpush.bf16.xpose.msra.mxu0 0
  %108 = vmatpush.bf16.xpose.msra.mxu0 0
  %109 = vmatpush.bf16.xpose.msra.mxu0 0
  %110 = vmatpush.bf16.xpose.msra.mxu0 0
  %111 = vmatpush.bf16.xpose.msra.mxu0 %v102
  %112 = vmatmul.bf16.gmra.mxu0 %v99
  %v113 = vpop.f32.mrf.mxu0
  %v114 = vadd.f32 0.0, %v113
  %v115 = vpop.f32.mrf.mxu0
  %116 = vdwg.mxu0
  %vm117 = vcmask 3072
  %v118 = vsel %vm117, %v57, -inf
  %v119 = vrot.slane %v118, 4
  %v120 = vmax.f32 %v118, %v119
  %v121 = vrot.slane %v120, 2
  %v122 = vmax.f32 %v120, %v121
  %v123 = vrot.slane %v122, 1
  %v124 = vmax.f32 %v122, %v123
  %v125 = vsel %vm117, %v76, -inf
  %v126 = vrot.slane %v125, 4
  %v127 = vmax.f32 %v125, %v126
  %v128 = vrot.slane %v127, 2
  %v129 = vmax.f32 %v127, %v128
  %v130 = vrot.slane %v129, 1
  %v131 = vmax.f32 %v129, %v130
  %v132 = vsel %vm117, %v95, -inf
  %v133 = vrot.slane %v132, 4
  %v134 = vmax.f32 %v132, %v133
  %v135 = vrot.slane %v134, 2
  %v136 = vmax.f32 %v134, %v135
  %v137 = vrot.slane %v136, 1
  %v138 = vmax.f32 %v136, %v137
  %v139 = vsel %vm117, %v114, -inf
  %v140 = vrot.slane %v139, 4
  %v141 = vmax.f32 %v139, %v140
  %v142 = vrot.slane %v141, 2
  %v143 = vmax.f32 %v141, %v142
  %v144 = vrot.slane %v143, 1
  %v145 = vmax.f32 %v143, %v144
  %v146 = vsub.f32 %v57, %v124
  %v147 = vsub.f32 %v76, %v131
  %v148 = vsub.f32 %v95, %v138
  %v149 = vsub.f32 %v114, %v145
  %v150 = vmul.f32 %v146, 1.442695
  %v151 = vpow.pop %v150
  %v152 = vmul.f32 %v147, 1.442695
  %v153 = vpow.pop %v152
  %v154 = vmul.f32 %v148, 1.442695
  %v155 = vpow.pop %v154
  %v156 = vmul.f32 %v149, 1.442695
  %v157 = vpow.pop %v156
  %v158 = vsel %vm117, %v151, 0.0
  %v159 = vrot.slane %v158, 4
  %v160 = vadd.f32 %v158, %v159
  %v161 = vrot.slane %v160, 2
  %v162 = vadd.f32 %v160, %v161
  %v163 = vrot.slane %v162, 1
  %v164 = vadd.f32 %v162, %v163
  %v165 = vsel %vm117, %v153, 0.0
  %v166 = vrot.slane %v165, 4
  %v167 = vadd.f32 %v165, %v166
  %v168 = vrot.slane %v167, 2
  %v169 = vadd.f32 %v167, %v168
  %v170 = vrot.slane %v169, 1
  %v171 = vadd.f32 %v169, %v170
  %v172 = vsel %vm117, %v155, 0.0
  %v173 = vrot.slane %v172, 4
  %v174 = vadd.f32 %v172, %v173
  %v175 = vrot.slane %v174, 2
  %v176 = vadd.f32 %v174, %v175
  %v177 = vrot.slane %v176, 1
  %v178 = vadd.f32 %v176, %v177
  %v179 = vsel %vm117, %v157, 0.0
  %v180 = vrot.slane %v179, 4
  %v181 = vadd.f32 %v179, %v180
  %v182 = vrot.slane %v181, 2
  %v183 = vadd.f32 %v181, %v182
  %v184 = vrot.slane %v183, 1
  %v185 = vadd.f32 %v183, %v184
  %v186 = vrcp.pop %v164
  %v187 = vmul.f32 %v164, %v186
  %v188 = vsub.f32 1.0, %v187
  %v189 = vmul.f32 %v186, %v188
  %v190 = vadd.f32 %v186, %v189
  %vm191 = vweird.f32 %v164
  %vm192 = vweird.f32 %v186
  %vm193 = vmor %vm191, %vm192
  %v194 = vsel %vm193, %v186, %v190
  %v195 = vand.u32 2147483647, %v164
  %vm196 = vcmp.eq.f32.partialorder %v195, 8.507059e+37
  %v197 = vand.u32 %v164, 2147483648
  %v198 = vor.u32 1.1754944e-38, %v197
  %v199 = vsel %vm196, %v198, %v194
  %v200 = vmul.f32 %v151, %v199
  %v201 = vrcp.pop %v171
  %v202 = vmul.f32 %v171, %v201
  %v203 = vsub.f32 1.0, %v202
  %v204 = vmul.f32 %v201, %v203
  %v205 = vadd.f32 %v201, %v204
  %vm206 = vweird.f32 %v171
  %vm207 = vweird.f32 %v201
  %vm208 = vmor %vm206, %vm207
  %v209 = vsel %vm208, %v201, %v205
  %v210 = vand.u32 2147483647, %v171
  %vm211 = vcmp.eq.f32.partialorder %v210, 8.507059e+37
  %v212 = vand.u32 %v171, 2147483648
  %v213 = vor.u32 1.1754944e-38, %v212
  %v214 = vsel %vm211, %v213, %v209
  %v215 = vmul.f32 %v153, %v214
  %v216 = vrcp.pop %v178
  %v217 = vmul.f32 %v178, %v216
  %v218 = vsub.f32 1.0, %v217
  %v219 = vmul.f32 %v216, %v218
  %v220 = vadd.f32 %v216, %v219
  %vm221 = vweird.f32 %v178
  %vm222 = vweird.f32 %v216
  %vm223 = vmor %vm221, %vm222
  %v224 = vsel %vm223, %v216, %v220
  %v225 = vand.u32 2147483647, %v178
  %vm226 = vcmp.eq.f32.partialorder %v225, 8.507059e+37
  %v227 = vand.u32 %v178, 2147483648
  %v228 = vor.u32 1.1754944e-38, %v227
  %v229 = vsel %vm226, %v228, %v224
  %v230 = vmul.f32 %v155, %v229
  %v231 = vrcp.pop %v185
  %v232 = vmul.f32 %v185, %v231
  %v233 = vsub.f32 1.0, %v232
  %v234 = vmul.f32 %v231, %v233
  %v235 = vadd.f32 %v231, %v234
  %vm236 = vweird.f32 %v185
  %vm237 = vweird.f32 %v231
  %vm238 = vmor %vm236, %vm237
  %v239 = vsel %vm238, %v231, %v235
  %v240 = vand.u32 2147483647, %v185
  %vm241 = vcmp.eq.f32.partialorder %v240, 8.507059e+37
  %v242 = vand.u32 %v185, 2147483648
  %v243 = vor.u32 1.1754944e-38, %v242
  %v244 = vsel %vm241, %v243, %v239
  %v245 = vmul.f32 %v157, %v244
  %v246 = vld [vmem:[%s1] sm:$0xf]
  %v247 = vld [vmem:[%s1 + $0x4] sm:$0xf]
  %v248 = vld [vmem:[%s1 + $0x8] sm:$0xf]
  %v249 = vld [vmem:[%s1 + $0xc] sm:$0xf]
  %251 = vset.pattern.permute.xlu0 0
  %252 = vperm.xlu0 %251, %v200
  %v253 = vpop.permute.xlu0 %252
  %256 = vset.pattern.permute.xlu0 0
  %257 = vperm.xlu0 %256, %v215
  %v258 = vpop.permute.xlu0 %257
  %261 = vset.pattern.permute.xlu0 0
  %262 = vperm.xlu0 %261, %v230
  %v263 = vpop.permute.xlu0 %262
  %266 = vset.pattern.permute.xlu0 0
  %267 = vperm.xlu0 %266, %v245
  %v268 = vpop.permute.xlu0 %267
  %v270 = vmul.f32 %v253, %v246
  %v271 = vmul.f32 %v258, %v247
  %v272 = vmul.f32 %v263, %v248
  %v273 = vmul.f32 %v268, %v249
  %vm274 = vcmask 257024
  %v275 = vsel %vm274, %v270, 0.0
  %v276 = vrot.slane %v275, 4
  %v277 = vadd.f32 %v275, %v276
  %v278 = vrot.slane %v277, 2
  %v279 = vadd.f32 %v277, %v278
  %v280 = vrot.slane %v279, 1
  %v281 = vadd.f32 %v279, %v280
  %v282 = vsel %vm274, %v271, 0.0
  %v283 = vrot.slane %v282, 4
  %v284 = vadd.f32 %v282, %v283
  %v285 = vrot.slane %v284, 2
  %v286 = vadd.f32 %v284, %v285
  %v287 = vrot.slane %v286, 1
  %v288 = vadd.f32 %v286, %v287
  %v289 = vsel %vm274, %v272, 0.0
  %v290 = vrot.slane %v289, 4
  %v291 = vadd.f32 %v289, %v290
  %v292 = vrot.slane %v291, 2
  %v293 = vadd.f32 %v291, %v292
  %v294 = vrot.slane %v293, 1
  %v295 = vadd.f32 %v293, %v294
  %v296 = vsel %vm274, %v273, 0.0
  %v297 = vrot.slane %v296, 4
  %v298 = vadd.f32 %v296, %v297
  %v299 = vrot.slane %v298, 2
  %v300 = vadd.f32 %v298, %v299
  %v301 = vrot.slane %v300, 1
  %v302 = vadd.f32 %v300, %v301
  %v303 = vld [vmem:[%s0] sm:$0x1]
  %v304 = vld [vmem:[%s0 + $0x1] sm:$0x1]
  %v305 = vld [vmem:[%s0 + $0x2] sm:$0x1]
  %v306 = vld [vmem:[%s0 + $0x3] sm:$0x1]
  %v307 = vadd.f32 %v303, %v281
  %v308 = vadd.f32 %v304, %v288
  %v309 = vadd.f32 %v305, %v295
  %v310 = vadd.f32 %v306, %v302
  %v311 = vpack.c.bf16 %v307, %v307
  %v312 = vpack.c.bf16 %v308, %v308
  %v313 = vpack.c.bf16 %v309, %v309
  %v314 = vpack.c.bf16 %v310, %v310
  %v315 = vld [vmem:[%s4] sm:$0xff]
  %v316 = vld [vmem:[%s4 + $0x8] sm:$0xff]
  %v317 = vld [vmem:[%s4 + $0x10] sm:$0xff]
  %v318 = vld [vmem:[%s4 + $0x18] sm:$0xff]
  %v319 = vpack.c.bf16 %v316, %v315
  %v320 = vpack.c.bf16 %v318, %v317
  %v321 = vld [vmem:[%s5] sm:$0x1]
  %v323 = vperm.slane %v321, 0
  %v329 = vunpack.c.l.b16 %v311
  %v330 = vunpack.c.l.b16 %v312
  %v331 = vunpack.c.l.b16 %v313
  %v332 = vunpack.c.l.b16 %v314
  %v333 = vrot.slane %v330, 7
  %vm334 = vcmask 1041409
  %v335 = vsel %vm334, %v333, %v329
  %v336 = vrot.slane %v331, 6
  %vm337 = vcmask 1042434
  %v338 = vsel %vm337, %v336, %v335
  %v339 = vrot.slane %v332, 5
  %vm340 = vcmask 1043459
  %v341 = vsel %vm340, %v339, %v338
  %v342 = vpack.c.b16 %v341, %v341
  %v344 = vsel %vm40, %v342, 0
  %346 = vmatpush.bf16.msra.mxu0 0
  %347 = vmatpush.bf16.msra.mxu0 0
  %348 = vmatpush.bf16.msra.mxu0 0
  %349 = vmatpush.bf16.msra.mxu0 0
  %350 = vmatpush.bf16.msra.mxu0 0
  %351 = vmatpush.bf16.msra.mxu0 0
  %352 = vmatpush.bf16.msra.mxu0 %v320
  %353 = vmatpush.bf16.msra.mxu0 %v319
  %354 = vmatmul.bf16.gmra.mxu0 %v344
  %v355 = vpop.f32.mrf.mxu0
  %v356 = vadd.f32 %v323, %v355
  %v357 = vpop.f32.mrf.mxu0
  %358 = vdwg.mxu0
  %v360 = vrot.slane %v356, 1
  %v361 = vrot.slane %v356, 2
  %v362 = vrot.slane %v356, 3
  %v366 = vtanh.pop %v356
  %v367 = vtanh.pop %v360
  %v368 = vtanh.pop %v361
  %v369 = vtanh.pop %v362
  %v370 = vld [vmem:[%s3] sm:$0x1]
  %v371 = vld [vmem:[%s3 + $0x1] sm:$0x1]
  %v372 = vld [vmem:[%s3 + $0x2] sm:$0x1]
  %v373 = vld [vmem:[%s3 + $0x3] sm:$0x1]
  %v374 = vmul.f32 %v370, %v366
  %v375 = vmul.f32 %v371, %v367
  %v376 = vmul.f32 %v372, %v368
  %v377 = vmul.f32 %v373, %v369
  %vm378 = vcmask 253952
  %v379 = vsel %vm378, %v374, 0.0
  %380 = vadd.xlane.f32.xlu0 %v379
  %v381 = vpop.xlane.xlu0 %380
  %v382 = vsel %vm378, %v375, 0.0
  %383 = vadd.xlane.f32.xlu0 %v382
  %v384 = vpop.xlane.xlu0 %383
  %v385 = vsel %vm378, %v376, 0.0
  %386 = vadd.xlane.f32.xlu0 %v385
  %v387 = vpop.xlane.xlu0 %386
  %v388 = vsel %vm378, %v377, 0.0
  %389 = vadd.xlane.f32.xlu0 %v388
  %v390 = vpop.xlane.xlu0 %389
  %v391 = vxor.u32 %v381, 2147483648
  %v392 = vxor.u32 %v384, 2147483648
  %v393 = vxor.u32 %v387, 2147483648
  %v394 = vxor.u32 %v390, 2147483648
  %v395 = vmul.f32 %v391, 1.442695
  %v396 = vpow.pop %v395
  %v397 = vmul.f32 %v392, 1.442695
  %v398 = vpow.pop %v397
  %v399 = vmul.f32 %v393, 1.442695
  %v400 = vpow.pop %v399
  %v401 = vmul.f32 %v394, 1.442695
  %v402 = vpow.pop %v401
  %v403 = vadd.f32 %v396, 1.0
  %v404 = vadd.f32 %v398, 1.0
  %v405 = vadd.f32 %v400, 1.0
  %v406 = vadd.f32 %v402, 1.0
  %v407 = vrcp.pop %v403
  %v408 = vmul.f32 %v403, %v407
  %v409 = vsub.f32 1.0, %v408
  %v410 = vmul.f32 %v407, %v409
  %v411 = vadd.f32 %v407, %v410
  %vm412 = vweird.f32 %v403
  %vm413 = vweird.f32 %v407
  %vm414 = vmor %vm412, %vm413
  %v415 = vsel %vm414, %v407, %v411
  %v416 = vand.u32 2147483647, %v403
  %vm417 = vcmp.eq.f32.partialorder %v416, 8.507059e+37
  %v418 = vand.u32 %v403, 2147483648
  %v419 = vor.u32 1.1754944e-38, %v418
  %v420 = vsel %vm417, %v419, %v415
  %v421 = vmul.f32 1.0, %v420
  %v422 = vrcp.pop %v404
  %v423 = vmul.f32 %v404, %v422
  %v424 = vsub.f32 1.0, %v423
  %v425 = vmul.f32 %v422, %v424
  %v426 = vadd.f32 %v422, %v425
  %vm427 = vweird.f32 %v404
  %vm428 = vweird.f32 %v422
  %vm429 = vmor %vm427, %vm428
  %v430 = vsel %vm429, %v422, %v426
  %v431 = vand.u32 2147483647, %v404
  %vm432 = vcmp.eq.f32.partialorder %v431, 8.507059e+37
  %v433 = vand.u32 %v404, 2147483648
  %v434 = vor.u32 1.1754944e-38, %v433
  %v435 = vsel %vm432, %v434, %v430
  %v436 = vmul.f32 1.0, %v435
  %v437 = vrcp.pop %v405
  %v438 = vmul.f32 %v405, %v437
  %v439 = vsub.f32 1.0, %v438
  %v440 = vmul.f32 %v437, %v439
  %v441 = vadd.f32 %v437, %v440
  %vm442 = vweird.f32 %v405
  %vm443 = vweird.f32 %v437
  %vm444 = vmor %vm442, %vm443
  %v445 = vsel %vm444, %v437, %v441
  %v446 = vand.u32 2147483647, %v405
  %vm447 = vcmp.eq.f32.partialorder %v446, 8.507059e+37
  %v448 = vand.u32 %v405, 2147483648
  %v449 = vor.u32 1.1754944e-38, %v448
  %v450 = vsel %vm447, %v449, %v445
  %v451 = vmul.f32 1.0, %v450
  %v452 = vrcp.pop %v406
  %v453 = vmul.f32 %v406, %v452
  %v454 = vsub.f32 1.0, %v453
  %v455 = vmul.f32 %v452, %v454
  %v456 = vadd.f32 %v452, %v455
  %vm457 = vweird.f32 %v406
  %vm458 = vweird.f32 %v452
  %vm459 = vmor %vm457, %vm458
  %v460 = vsel %vm459, %v452, %v456
  %v461 = vand.u32 2147483647, %v406
  %vm462 = vcmp.eq.f32.partialorder %v461, 8.507059e+37
  %v463 = vand.u32 %v406, 2147483648
  %v464 = vor.u32 1.1754944e-38, %v463
  %v465 = vsel %vm462, %v464, %v460
  %v466 = vmul.f32 1.0, %v465
  %vm467 = vcmask 0
  %468 = vst.msk [vmem:[%s6] sm:$0x1] %vm467, %v421
  %469 = vst.msk [vmem:[%s6 + $0x1] sm:$0x1] %vm467, %v436
  %470 = vst.msk [vmem:[%s6 + $0x2] sm:$0x1] %vm467, %v451
  %471 = vst.msk [vmem:[%s6 + $0x3] sm:$0x1] %vm467, %v466
  // Predicated region
  $region26: #{kgcn_forward.3} parent=0 // pred_check
    _
  $region27: #{kgcn_forward.3} parent=0 // pred_check_branch
    %473 = sbr.rel (0) target = $region29
  $region28: #{kgcn_forward.3} parent=0 // pred_region
    _
  $region29: #{kgcn_forward.3} parent=0 // pred_fallthru
    _
  // Predicated region
  $region30: #{kgcn_forward.3} parent=0 // pred_check
    _
  $region31: #{kgcn_forward.3} parent=0 // pred_check_branch
    %475 = sbr.rel (0) target = $region33
  $region32: #{kgcn_forward.3} parent=0 // pred_region
    _
  $region33: #{kgcn_forward.3} parent=0 // pred_fallthru
    _

// kernel: kgcn_forward.2
$region0: #{kgcn_forward.2}
  #allocation0 [shape = 'u32[]', space=smem, size = 0x4, offset = 0x4, fixed_abs, tag = 'smem constant byte address 0x4 - core index']
  #allocation1 [shape = 'u32[72,128]{1,0:T(1,128)}', space=vmem, size = 0x9000, scoped, tag = 'internal scratch']
  %s0 = inlined_call_operand.vmem [shape: f32[4,5,32], index: 0, kind: input, shape index: {}]
  %s1 = inlined_call_operand.vmem [shape: f32[4,5,4,32], index: 1, kind: input, shape index: {}]
  %s2 = inlined_call_operand.vmem [shape: f32[4,20,32], index: 2, kind: input, shape index: {}]
  %s3 = inlined_call_operand.vmem [shape: f32[4,1,32], index: 3, kind: input, shape index: {}]
  %s4 = inlined_call_operand.vmem [shape: f32[32,32], index: 4, kind: input, shape index: {}]
  %s5 = inlined_call_operand.vmem [shape: f32[1,32], index: 5, kind: input, shape index: {}]
  %s6 = inlined_call_operand.vmem [shape: f32[4,5,32], index: 6, kind: output, shape index: {}]
  %s7 = sld [smem:[#allocation0]]
  $region34: #{kgcn_forward.2} parent=0
    _
  %s9 = ssub.s32 1, %s7
  %s10 = scalar_select 0, %s9, %s7
  // Predicated region
  $region2: #{kgcn_forward.2} parent=0 // pred_check
    _
  $region3: #{kgcn_forward.2} parent=0 // pred_check_branch
    %12 = sbr.rel (0) target = $region5
  $region4: #{kgcn_forward.2} parent=0 // pred_region
    _
  $region5: #{kgcn_forward.2} parent=0 // pred_fallthru
    _
  // Predicated region
  $region6: #{kgcn_forward.2} parent=0 // pred_check
    _
  $region7: #{kgcn_forward.2} parent=0 // pred_check_branch
    %14 = sbr.rel (0) target = $region9
  $region8: #{kgcn_forward.2} parent=0 // pred_region
    _
  $region9: #{kgcn_forward.2} parent=0 // pred_fallthru
    _
  // Predicated region
  $region10: #{kgcn_forward.2} parent=0 // pred_check
    _
  $region11: #{kgcn_forward.2} parent=0 // pred_check_branch
    %16 = sbr.rel (0) target = $region13
  $region12: #{kgcn_forward.2} parent=0 // pred_region
    _
  $region13: #{kgcn_forward.2} parent=0 // pred_fallthru
    _
  // Predicated region
  $region14: #{kgcn_forward.2} parent=0 // pred_check
    _
  $region15: #{kgcn_forward.2} parent=0 // pred_check_branch
    %18 = sbr.rel (0) target = $region17
  $region16: #{kgcn_forward.2} parent=0 // pred_region
    _
  $region17: #{kgcn_forward.2} parent=0 // pred_fallthru
    _
  // Predicated region
  $region18: #{kgcn_forward.2} parent=0 // pred_check
    _
  $region19: #{kgcn_forward.2} parent=0 // pred_check_branch
    %20 = sbr.rel (0) target = $region21
  $region20: #{kgcn_forward.2} parent=0 // pred_region
    _
  $region21: #{kgcn_forward.2} parent=0 // pred_fallthru
    _
  // Predicated region
  $region22: #{kgcn_forward.2} parent=0 // pred_check
    _
  $region23: #{kgcn_forward.2} parent=0 // pred_check_branch
    %22 = sbr.rel (0) target = $region25
  $region24: #{kgcn_forward.2} parent=0 // pred_region
    _
  $region25: #{kgcn_forward.2} parent=0 // pred_fallthru
    _
  %v24 = vld [vmem:[%s3] sm:$0x1]
  %v25 = vld [vmem:[%s3 + $0x1] sm:$0x1]
  %v26 = vld [vmem:[%s3 + $0x2] sm:$0x1]
  %v27 = vld [vmem:[%s3 + $0x3] sm:$0x1]
  %v28 = vld [vmem:[%s2] sm:$0xff]
  %v29 = vld [vmem:[%s2 + $0x8] sm:$0xff]
  %v30 = vld [vmem:[%s2 + $0x10] sm:$0xf]
  %v31 = vld [vmem:[%s2 + $0x18] sm:$0xff]
  %v32 = vld [vmem:[%s2 + $0x20] sm:$0xff]
  %v33 = vld [vmem:[%s2 + $0x28] sm:$0xf]
  %v34 = vld [vmem:[%s2 + $0x30] sm:$0xff]
  %v35 = vld [vmem:[%s2 + $0x38] sm:$0xff]
  %v36 = vld [vmem:[%s2 + $0x40] sm:$0xf]
  %v37 = vld [vmem:[%s2 + $0x48] sm:$0xff]
  %v38 = vld [vmem:[%s2 + $0x50] sm:$0xff]
  %v39 = vld [vmem:[%s2 + $0x58] sm:$0xf]
  %v40 = vpack.c.bf16 %v28, %v28
  %v41 = vpack.c.bf16 %v29, %v29
  %v42 = vpack.c.bf16 %v30, %v30
  %v43 = vpack.c.bf16 %v31, %v31
  %v44 = vpack.c.bf16 %v32, %v32
  %v45 = vpack.c.bf16 %v33, %v33
  %v46 = vpack.c.bf16 %v34, %v34
  %v47 = vpack.c.bf16 %v35, %v35
  %v48 = vpack.c.bf16 %v36, %v36
  %v49 = vpack.c.bf16 %v37, %v37
  %v50 = vpack.c.bf16 %v38, %v38
  %v51 = vpack.c.bf16 %v39, %v39
  %v52 = vpack.c.bf16 %v24, %v24
  %v53 = vpack.c.bf16 %v25, %v25
  %v54 = vpack.c.bf16 %v26, %v26
  %v55 = vpack.c.bf16 %v27, %v27
  %v59 = vunpack.c.l.b16 %v40
  %v60 = vunpack.c.l.b16 %v41
  %v61 = vunpack.c.l.b16 %v42
  %v62 = vpack.c.b16 %v60, %v59
  %v63 = vpack.c.b16 %v61, %v61
  %vm64 = vcmask 261120
  %v66 = vsel %vm64, %v62, 0
  %v69 = vsel %vm64, %v63, 0
  %v72 = vsel %vm64, %v52, 0
  %74 = vmatpush.bf16.xpose.msra.mxu0 0
  %75 = vmatpush.bf16.xpose.msra.mxu0 0
  %76 = vmatpush.bf16.xpose.msra.mxu0 0
  %77 = vmatpush.bf16.xpose.msra.mxu0 0
  %78 = vmatpush.bf16.xpose.msra.mxu0 0
  %79 = vmatpush.bf16.xpose.msra.mxu0 0
  %80 = vmatpush.bf16.xpose.msra.mxu0 0
  %81 = vmatpush.bf16.xpose.msra.mxu0 %v72
  %82 = vmatmul.bf16.gmra.mxu0 %v66
  %v83 = vpop.f32.mrf.mxu0
  %v84 = vadd.f32 0.0, %v83
  %v85 = vpop.f32.mrf.mxu0
  %v86 = vadd.f32 0.0, %v85
  %87 = vmatmul.bf16.gmra.mxu0 %v69
  %v88 = vpop.f32.mrf.mxu0
  %v89 = vadd.f32 0.0, %v88
  %v90 = vpop.f32.mrf.mxu0
  %91 = vdwg.mxu0
  %v95 = vunpack.c.l.b16 %v43
  %v96 = vunpack.c.l.b16 %v44
  %v97 = vunpack.c.l.b16 %v45
  %v98 = vpack.c.b16 %v96, %v95
  %v99 = vpack.c.b16 %v97, %v97
  %v101 = vsel %vm64, %v98, 0
  %v104 = vsel %vm64, %v99, 0
  %v107 = vsel %vm64, %v53, 0
  %109 = vmatpush.bf16.xpose.msra.mxu0 0
  %110 = vmatpush.bf16.xpose.msra.mxu0 0
  %111 = vmatpush.bf16.xpose.msra.mxu0 0
  %112 = vmatpush.bf16.xpose.msra.mxu0 0
  %113 = vmatpush.bf16.xpose.msra.mxu0 0
  %114 = vmatpush.bf16.xpose.msra.mxu0 0
  %115 = vmatpush.bf16.xpose.msra.mxu0 0
  %116 = vmatpush.bf16.xpose.msra.mxu0 %v107
  %117 = vmatmul.bf16.gmra.mxu0 %v101
  %v118 = vpop.f32.mrf.mxu0
  %v119 = vadd.f32 0.0, %v118
  %v120 = vpop.f32.mrf.mxu0
  %v121 = vadd.f32 0.0, %v120
  %122 = vmatmul.bf16.gmra.mxu0 %v104
  %v123 = vpop.f32.mrf.mxu0
  %v124 = vadd.f32 0.0, %v123
  %v125 = vpop.f32.mrf.mxu0
  %126 = vdwg.mxu0
  %v130 = vunpack.c.l.b16 %v46
  %v131 = vunpack.c.l.b16 %v47
  %v132 = vunpack.c.l.b16 %v48
  %v133 = vpack.c.b16 %v131, %v130
  %v134 = vpack.c.b16 %v132, %v132
  %v136 = vsel %vm64, %v133, 0
  %v139 = vsel %vm64, %v134, 0
  %v142 = vsel %vm64, %v54, 0
  %144 = vmatpush.bf16.xpose.msra.mxu0 0
  %145 = vmatpush.bf16.xpose.msra.mxu0 0
  %146 = vmatpush.bf16.xpose.msra.mxu0 0
  %147 = vmatpush.bf16.xpose.msra.mxu0 0
  %148 = vmatpush.bf16.xpose.msra.mxu0 0
  %149 = vmatpush.bf16.xpose.msra.mxu0 0
  %150 = vmatpush.bf16.xpose.msra.mxu0 0
  %151 = vmatpush.bf16.xpose.msra.mxu0 %v142
  %152 = vmatmul.bf16.gmra.mxu0 %v136
  %v153 = vpop.f32.mrf.mxu0
  %v154 = vadd.f32 0.0, %v153
  %v155 = vpop.f32.mrf.mxu0
  %v156 = vadd.f32 0.0, %v155
  %157 = vmatmul.bf16.gmra.mxu0 %v139
  %v158 = vpop.f32.mrf.mxu0
  %v159 = vadd.f32 0.0, %v158
  %v160 = vpop.f32.mrf.mxu0
  %161 = vdwg.mxu0
  %v165 = vunpack.c.l.b16 %v49
  %v166 = vunpack.c.l.b16 %v50
  %v167 = vunpack.c.l.b16 %v51
  %v168 = vpack.c.b16 %v166, %v165
  %v169 = vpack.c.b16 %v167, %v167
  %v171 = vsel %vm64, %v168, 0
  %v174 = vsel %vm64, %v169, 0
  %v177 = vsel %vm64, %v55, 0
  %179 = vmatpush.bf16.xpose.msra.mxu0 0
  %180 = vmatpush.bf16.xpose.msra.mxu0 0
  %181 = vmatpush.bf16.xpose.msra.mxu0 0
  %182 = vmatpush.bf16.xpose.msra.mxu0 0
  %183 = vmatpush.bf16.xpose.msra.mxu0 0
  %184 = vmatpush.bf16.xpose.msra.mxu0 0
  %185 = vmatpush.bf16.xpose.msra.mxu0 0
  %186 = vmatpush.bf16.xpose.msra.mxu0 %v177
  %187 = vmatmul.bf16.gmra.mxu0 %v171
  %v188 = vpop.f32.mrf.mxu0
  %v189 = vadd.f32 0.0, %v188
  %v190 = vpop.f32.mrf.mxu0
  %v191 = vadd.f32 0.0, %v190
  %192 = vmatmul.bf16.gmra.mxu0 %v174
  %v193 = vpop.f32.mrf.mxu0
  %v194 = vadd.f32 0.0, %v193
  %v195 = vpop.f32.mrf.mxu0
  %196 = vdwg.mxu0
  %v205 = vrot.slane %v84, 4
  %v206 = vrot.slane %v86, 4
  %v207 = vrot.slane %v119, 4
  %v208 = vrot.slane %v121, 4
  %v209 = vrot.slane %v154, 4
  %v210 = vrot.slane %v156, 4
  %v211 = vrot.slane %v189, 4
  %v212 = vrot.slane %v191, 4
  %vm221 = vcmask 3072
  %v222 = vsel %vm221, %v84, -inf
  %v223 = vrot.slane %v222, 4
  %v224 = vmax.f32 %v222, %v223
  %v225 = vrot.slane %v224, 2
  %v226 = vmax.f32 %v224, %v225
  %v227 = vrot.slane %v226, 1
  %v228 = vmax.f32 %v226, %v227
  %v229 = vsel %vm221, %v205, -inf
  %v230 = vrot.slane %v229, 4
  %v231 = vmax.f32 %v229, %v230
  %v232 = vrot.slane %v231, 2
  %v233 = vmax.f32 %v231, %v232
  %v234 = vrot.slane %v233, 1
  %v235 = vmax.f32 %v233, %v234
  %v236 = vsel %vm221, %v86, -inf
  %v237 = vrot.slane %v236, 4
  %v238 = vmax.f32 %v236, %v237
  %v239 = vrot.slane %v238, 2
  %v240 = vmax.f32 %v238, %v239
  %v241 = vrot.slane %v240, 1
  %v242 = vmax.f32 %v240, %v241
  %v243 = vsel %vm221, %v206, -inf
  %v244 = vrot.slane %v243, 4
  %v245 = vmax.f32 %v243, %v244
  %v246 = vrot.slane %v245, 2
  %v247 = vmax.f32 %v245, %v246
  %v248 = vrot.slane %v247, 1
  %v249 = vmax.f32 %v247, %v248
  %v250 = vsel %vm221, %v89, -inf
  %v251 = vrot.slane %v250, 4
  %v252 = vmax.f32 %v250, %v251
  %v253 = vrot.slane %v252, 2
  %v254 = vmax.f32 %v252, %v253
  %v255 = vrot.slane %v254, 1
  %v256 = vmax.f32 %v254, %v255
  %v257 = vsel %vm221, %v119, -inf
  %v258 = vrot.slane %v257, 4
  %v259 = vmax.f32 %v257, %v258
  %v260 = vrot.slane %v259, 2
  %v261 = vmax.f32 %v259, %v260
  %v262 = vrot.slane %v261, 1
  %v263 = vmax.f32 %v261, %v262
  %v264 = vsel %vm221, %v207, -inf
  %v265 = vrot.slane %v264, 4
  %v266 = vmax.f32 %v264, %v265
  %v267 = vrot.slane %v266, 2
  %v268 = vmax.f32 %v266, %v267
  %v269 = vrot.slane %v268, 1
  %v270 = vmax.f32 %v268, %v269
  %v271 = vsel %vm221, %v121, -inf
  %v272 = vrot.slane %v271, 4
  %v273 = vmax.f32 %v271, %v272
  %v274 = vrot.slane %v273, 2
  %v275 = vmax.f32 %v273, %v274
  %v276 = vrot.slane %v275, 1
  %v277 = vmax.f32 %v275, %v276
  %v278 = vsel %vm221, %v208, -inf
  %v279 = vrot.slane %v278, 4
  %v280 = vmax.f32 %v278, %v279
  %v281 = vrot.slane %v280, 2
  %v282 = vmax.f32 %v280, %v281
  %v283 = vrot.slane %v282, 1
  %v284 = vmax.f32 %v282, %v283
  %v285 = vsel %vm221, %v124, -inf
  %v286 = vrot.slane %v285, 4
  %v287 = vmax.f32 %v285, %v286
  %v288 = vrot.slane %v287, 2
  %v289 = vmax.f32 %v287, %v288
  %v290 = vrot.slane %v289, 1
  %v291 = vmax.f32 %v289, %v290
  %v292 = vsel %vm221, %v154, -inf
  %v293 = vrot.slane %v292, 4
  %v294 = vmax.f32 %v292, %v293
  %v295 = vrot.slane %v294, 2
  %v296 = vmax.f32 %v294, %v295
  %v297 = vrot.slane %v296, 1
  %v298 = vmax.f32 %v296, %v297
  %v299 = vsel %vm221, %v209, -inf
  %v300 = vrot.slane %v299, 4
  %v301 = vmax.f32 %v299, %v300
  %v302 = vrot.slane %v301, 2
  %v303 = vmax.f32 %v301, %v302
  %v304 = vrot.slane %v303, 1
  %v305 = vmax.f32 %v303, %v304
  %v306 = vsel %vm221, %v156, -inf
  %v307 = vrot.slane %v306, 4
  %v308 = vmax.f32 %v306, %v307
  %v309 = vrot.slane %v308, 2
  %v310 = vmax.f32 %v308, %v309
  %v311 = vrot.slane %v310, 1
  %v312 = vmax.f32 %v310, %v311
  %v313 = vsel %vm221, %v210, -inf
  %v314 = vrot.slane %v313, 4
  %v315 = vmax.f32 %v313, %v314
  %v316 = vrot.slane %v315, 2
  %v317 = vmax.f32 %v315, %v316
  %v318 = vrot.slane %v317, 1
  %v319 = vmax.f32 %v317, %v318
  %v320 = vsel %vm221, %v159, -inf
  %v321 = vrot.slane %v320, 4
  %v322 = vmax.f32 %v320, %v321
  %v323 = vrot.slane %v322, 2
  %v324 = vmax.f32 %v322, %v323
  %v325 = vrot.slane %v324, 1
  %v326 = vmax.f32 %v324, %v325
  %v327 = vsel %vm221, %v189, -inf
  %v328 = vrot.slane %v327, 4
  %v329 = vmax.f32 %v327, %v328
  %v330 = vrot.slane %v329, 2
  %v331 = vmax.f32 %v329, %v330
  %v332 = vrot.slane %v331, 1
  %v333 = vmax.f32 %v331, %v332
  %v334 = vsel %vm221, %v211, -inf
  %v335 = vrot.slane %v334, 4
  %v336 = vmax.f32 %v334, %v335
  %v337 = vrot.slane %v336, 2
  %v338 = vmax.f32 %v336, %v337
  %v339 = vrot.slane %v338, 1
  %v340 = vmax.f32 %v338, %v339
  %v341 = vsel %vm221, %v191, -inf
  %v342 = vrot.slane %v341, 4
  %v343 = vmax.f32 %v341, %v342
  %v344 = vrot.slane %v343, 2
  %v345 = vmax.f32 %v343, %v344
  %v346 = vrot.slane %v345, 1
  %v347 = vmax.f32 %v345, %v346
  %v348 = vsel %vm221, %v212, -inf
  %v349 = vrot.slane %v348, 4
  %v350 = vmax.f32 %v348, %v349
  %v351 = vrot.slane %v350, 2
  %v352 = vmax.f32 %v350, %v351
  %v353 = vrot.slane %v352, 1
  %v354 = vmax.f32 %v352, %v353
  %v355 = vsel %vm221, %v194, -inf
  %v356 = vrot.slane %v355, 4
  %v357 = vmax.f32 %v355, %v356
  %v358 = vrot.slane %v357, 2
  %v359 = vmax.f32 %v357, %v358
  %v360 = vrot.slane %v359, 1
  %v361 = vmax.f32 %v359, %v360
  %v362 = vsub.f32 %v84, %v228
  %v363 = vsub.f32 %v205, %v235
  %v364 = vsub.f32 %v86, %v242
  %v365 = vsub.f32 %v206, %v249
  %v366 = vsub.f32 %v89, %v256
  %v367 = vsub.f32 %v119, %v263
  %v368 = vsub.f32 %v207, %v270
  %v369 = vsub.f32 %v121, %v277
  %v370 = vsub.f32 %v208, %v284
  %v371 = vsub.f32 %v124, %v291
  %v372 = vsub.f32 %v154, %v298
  %v373 = vsub.f32 %v209, %v305
  %v374 = vsub.f32 %v156, %v312
  %v375 = vsub.f32 %v210, %v319
  %v376 = vsub.f32 %v159, %v326
  %v377 = vsub.f32 %v189, %v333
  %v378 = vsub.f32 %v211, %v340
  %v379 = vsub.f32 %v191, %v347
  %v380 = vsub.f32 %v212, %v354
  %v381 = vsub.f32 %v194, %v361
  %v382 = vmul.f32 %v362, 1.442695
  %v383 = vpow.pop %v382
  %v384 = vmul.f32 %v363, 1.442695
  %v385 = vpow.pop %v384
  %v386 = vmul.f32 %v364, 1.442695
  %v387 = vpow.pop %v386
  %v388 = vmul.f32 %v365, 1.442695
  %v389 = vpow.pop %v388
  %v390 = vmul.f32 %v366, 1.442695
  %v391 = vpow.pop %v390
  %v392 = vmul.f32 %v367, 1.442695
  %v393 = vpow.pop %v392
  %v394 = vmul.f32 %v368, 1.442695
  %v395 = vpow.pop %v394
  %v396 = vmul.f32 %v369, 1.442695
  %v397 = vpow.pop %v396
  %v398 = vmul.f32 %v370, 1.442695
  %v399 = vpow.pop %v398
  %v400 = vmul.f32 %v371, 1.442695
  %v401 = vpow.pop %v400
  %v402 = vmul.f32 %v372, 1.442695
  %v403 = vpow.pop %v402
  %v404 = vmul.f32 %v373, 1.442695
  %v405 = vpow.pop %v404
  %v406 = vmul.f32 %v374, 1.442695
  %v407 = vpow.pop %v406
  %v408 = vmul.f32 %v375, 1.442695
  %v409 = vpow.pop %v408
  %v410 = vmul.f32 %v376, 1.442695
  %v411 = vpow.pop %v410
  %v412 = vmul.f32 %v377, 1.442695
  %v413 = vpow.pop %v412
  %v414 = vmul.f32 %v378, 1.442695
  %v415 = vpow.pop %v414
  %v416 = vmul.f32 %v379, 1.442695
  %v417 = vpow.pop %v416
  %v418 = vmul.f32 %v380, 1.442695
  %v419 = vpow.pop %v418
  %v420 = vmul.f32 %v381, 1.442695
  %v421 = vpow.pop %v420
  %v422 = vsel %vm221, %v383, 0.0
  %v423 = vrot.slane %v422, 4
  %v424 = vadd.f32 %v422, %v423
  %v425 = vrot.slane %v424, 2
  %v426 = vadd.f32 %v424, %v425
  %v427 = vrot.slane %v426, 1
  %v428 = vadd.f32 %v426, %v427
  %v429 = vsel %vm221, %v385, 0.0
  %v430 = vrot.slane %v429, 4
  %v431 = vadd.f32 %v429, %v430
  %v432 = vrot.slane %v431, 2
  %v433 = vadd.f32 %v431, %v432
  %v434 = vrot.slane %v433, 1
  %v435 = vadd.f32 %v433, %v434
  %v436 = vsel %vm221, %v387, 0.0
  %v437 = vrot.slane %v436, 4
  %v438 = vadd.f32 %v436, %v437
  %v439 = vrot.slane %v438, 2
  %v440 = vadd.f32 %v438, %v439
  %v441 = vrot.slane %v440, 1
  %v442 = vadd.f32 %v440, %v441
  %v443 = vsel %vm221, %v389, 0.0
  %v444 = vrot.slane %v443, 4
  %v445 = vadd.f32 %v443, %v444
  %v446 = vrot.slane %v445, 2
  %v447 = vadd.f32 %v445, %v446
  %v448 = vrot.slane %v447, 1
  %v449 = vadd.f32 %v447, %v448
  %v450 = vsel %vm221, %v391, 0.0
  %v451 = vrot.slane %v450, 4
  %v452 = vadd.f32 %v450, %v451
  %v453 = vrot.slane %v452, 2
  %v454 = vadd.f32 %v452, %v453
  %v455 = vrot.slane %v454, 1
  %v456 = vadd.f32 %v454, %v455
  %v457 = vsel %vm221, %v393, 0.0
  %v458 = vrot.slane %v457, 4
  %v459 = vadd.f32 %v457, %v458
  %v460 = vrot.slane %v459, 2
  %v461 = vadd.f32 %v459, %v460
  %v462 = vrot.slane %v461, 1
  %v463 = vadd.f32 %v461, %v462
  %v464 = vsel %vm221, %v395, 0.0
  %v465 = vrot.slane %v464, 4
  %v466 = vadd.f32 %v464, %v465
  %v467 = vrot.slane %v466, 2
  %v468 = vadd.f32 %v466, %v467
  %v469 = vrot.slane %v468, 1
  %v470 = vadd.f32 %v468, %v469
  %v471 = vsel %vm221, %v397, 0.0
  %v472 = vrot.slane %v471, 4
  %v473 = vadd.f32 %v471, %v472
  %v474 = vrot.slane %v473, 2
  %v475 = vadd.f32 %v473, %v474
  %v476 = vrot.slane %v475, 1
  %v477 = vadd.f32 %v475, %v476
  %v478 = vsel %vm221, %v399, 0.0
  %v479 = vrot.slane %v478, 4
  %v480 = vadd.f32 %v478, %v479
  %v481 = vrot.slane %v480, 2
  %v482 = vadd.f32 %v480, %v481
  %v483 = vrot.slane %v482, 1
  %v484 = vadd.f32 %v482, %v483
  %v485 = vsel %vm221, %v401, 0.0
  %v486 = vrot.slane %v485, 4
  %v487 = vadd.f32 %v485, %v486
  %v488 = vrot.slane %v487, 2
  %v489 = vadd.f32 %v487, %v488
  %v490 = vrot.slane %v489, 1
  %v491 = vadd.f32 %v489, %v490
  %v492 = vsel %vm221, %v403, 0.0
  %v493 = vrot.slane %v492, 4
  %v494 = vadd.f32 %v492, %v493
  %v495 = vrot.slane %v494, 2
  %v496 = vadd.f32 %v494, %v495
  %v497 = vrot.slane %v496, 1
  %v498 = vadd.f32 %v496, %v497
  %v499 = vsel %vm221, %v405, 0.0
  %v500 = vrot.slane %v499, 4
  %v501 = vadd.f32 %v499, %v500
  %v502 = vrot.slane %v501, 2
  %v503 = vadd.f32 %v501, %v502
  %v504 = vrot.slane %v503, 1
  %v505 = vadd.f32 %v503, %v504
  %v506 = vsel %vm221, %v407, 0.0
  %v507 = vrot.slane %v506, 4
  %v508 = vadd.f32 %v506, %v507
  %v509 = vrot.slane %v508, 2
  %v510 = vadd.f32 %v508, %v509
  %v511 = vrot.slane %v510, 1
  %v512 = vadd.f32 %v510, %v511
  %v513 = vsel %vm221, %v409, 0.0
  %v514 = vrot.slane %v513, 4
  %v515 = vadd.f32 %v513, %v514
  %v516 = vrot.slane %v515, 2
  %v517 = vadd.f32 %v515, %v516
  %v518 = vrot.slane %v517, 1
  %v519 = vadd.f32 %v517, %v518
  %v520 = vsel %vm221, %v411, 0.0
  %v521 = vrot.slane %v520, 4
  %v522 = vadd.f32 %v520, %v521
  %v523 = vrot.slane %v522, 2
  %v524 = vadd.f32 %v522, %v523
  %v525 = vrot.slane %v524, 1
  %v526 = vadd.f32 %v524, %v525
  %v527 = vsel %vm221, %v413, 0.0
  %v528 = vrot.slane %v527, 4
  %v529 = vadd.f32 %v527, %v528
  %v530 = vrot.slane %v529, 2
  %v531 = vadd.f32 %v529, %v530
  %v532 = vrot.slane %v531, 1
  %v533 = vadd.f32 %v531, %v532
  %v534 = vsel %vm221, %v415, 0.0
  %v535 = vrot.slane %v534, 4
  %v536 = vadd.f32 %v534, %v535
  %v537 = vrot.slane %v536, 2
  %v538 = vadd.f32 %v536, %v537
  %v539 = vrot.slane %v538, 1
  %v540 = vadd.f32 %v538, %v539
  %v541 = vsel %vm221, %v417, 0.0
  %v542 = vrot.slane %v541, 4
  %v543 = vadd.f32 %v541, %v542
  %v544 = vrot.slane %v543, 2
  %v545 = vadd.f32 %v543, %v544
  %v546 = vrot.slane %v545, 1
  %v547 = vadd.f32 %v545, %v546
  %v548 = vsel %vm221, %v419, 0.0
  %v549 = vrot.slane %v548, 4
  %v550 = vadd.f32 %v548, %v549
  %v551 = vrot.slane %v550, 2
  %v552 = vadd.f32 %v550, %v551
  %v553 = vrot.slane %v552, 1
  %v554 = vadd.f32 %v552, %v553
  %v555 = vsel %vm221, %v421, 0.0
  %v556 = vrot.slane %v555, 4
  %v557 = vadd.f32 %v555, %v556
  %v558 = vrot.slane %v557, 2
  %v559 = vadd.f32 %v557, %v558
  %v560 = vrot.slane %v559, 1
  %v561 = vadd.f32 %v559, %v560
  %v562 = vrcp.pop %v428
  %v563 = vmul.f32 %v428, %v562
  %v564 = vsub.f32 1.0, %v563
  %v565 = vmul.f32 %v562, %v564
  %v566 = vadd.f32 %v562, %v565
  %vm567 = vweird.f32 %v428
  %vm568 = vweird.f32 %v562
  %vm569 = vmor %vm567, %vm568
  %v570 = vsel %vm569, %v562, %v566
  %v571 = vand.u32 2147483647, %v428
  %vm572 = vcmp.eq.f32.partialorder %v571, 8.507059e+37
  %v573 = vand.u32 %v428, 2147483648
  %v574 = vor.u32 1.1754944e-38, %v573
  %v575 = vsel %vm572, %v574, %v570
  %v576 = vmul.f32 %v383, %v575
  %v577 = vrcp.pop %v435
  %v578 = vmul.f32 %v435, %v577
  %v579 = vsub.f32 1.0, %v578
  %v580 = vmul.f32 %v577, %v579
  %v581 = vadd.f32 %v577, %v580
  %vm582 = vweird.f32 %v435
  %vm583 = vweird.f32 %v577
  %vm584 = vmor %vm582, %vm583
  %v585 = vsel %vm584, %v577, %v581
  %v586 = vand.u32 2147483647, %v435
  %vm587 = vcmp.eq.f32.partialorder %v586, 8.507059e+37
  %v588 = vand.u32 %v435, 2147483648
  %v589 = vor.u32 1.1754944e-38, %v588
  %v590 = vsel %vm587, %v589, %v585
  %v591 = vmul.f32 %v385, %v590
  %v592 = vrcp.pop %v442
  %v593 = vmul.f32 %v442, %v592
  %v594 = vsub.f32 1.0, %v593
  %v595 = vmul.f32 %v592, %v594
  %v596 = vadd.f32 %v592, %v595
  %vm597 = vweird.f32 %v442
  %vm598 = vweird.f32 %v592
  %vm599 = vmor %vm597, %vm598
  %v600 = vsel %vm599, %v592, %v596
  %v601 = vand.u32 2147483647, %v442
  %vm602 = vcmp.eq.f32.partialorder %v601, 8.507059e+37
  %v603 = vand.u32 %v442, 2147483648
  %v604 = vor.u32 1.1754944e-38, %v603
  %v605 = vsel %vm602, %v604, %v600
  %v606 = vmul.f32 %v387, %v605
  %v607 = vrcp.pop %v449
  %v608 = vmul.f32 %v449, %v607
  %v609 = vsub.f32 1.0, %v608
  %v610 = vmul.f32 %v607, %v609
  %v611 = vadd.f32 %v607, %v610
  %vm612 = vweird.f32 %v449
  %vm613 = vweird.f32 %v607
  %vm614 = vmor %vm612, %vm613
  %v615 = vsel %vm614, %v607, %v611
  %v616 = vand.u32 2147483647, %v449
  %vm617 = vcmp.eq.f32.partialorder %v616, 8.507059e+37
  %v618 = vand.u32 %v449, 2147483648
  %v619 = vor.u32 1.1754944e-38, %v618
  %v620 = vsel %vm617, %v619, %v615
  %v621 = vmul.f32 %v389, %v620
  %v622 = vrcp.pop %v456
  %v623 = vmul.f32 %v456, %v622
  %v624 = vsub.f32 1.0, %v623
  %v625 = vmul.f32 %v622, %v624
  %v626 = vadd.f32 %v622, %v625
  %vm627 = vweird.f32 %v456
  %vm628 = vweird.f32 %v622
  %vm629 = vmor %vm627, %vm628
  %v630 = vsel %vm629, %v622, %v626
  %v631 = vand.u32 2147483647, %v456
  %vm632 = vcmp.eq.f32.partialorder %v631, 8.507059e+37
  %v633 = vand.u32 %v456, 2147483648
  %v634 = vor.u32 1.1754944e-38, %v633
  %v635 = vsel %vm632, %v634, %v630
  %v636 = vmul.f32 %v391, %v635
  %v637 = vrcp.pop %v463
  %v638 = vmul.f32 %v463, %v637
  %v639 = vsub.f32 1.0, %v638
  %v640 = vmul.f32 %v637, %v639
  %v641 = vadd.f32 %v637, %v640
  %vm642 = vweird.f32 %v463
  %vm643 = vweird.f32 %v637
  %vm644 = vmor %vm642, %vm643
  %v645 = vsel %vm644, %v637, %v641
  %v646 = vand.u32 2147483647, %v463
  %vm647 = vcmp.eq.f32.partialorder %v646, 8.507059e+37
  %v648 = vand.u32 %v463, 2147483648
  %v649 = vor.u32 1.1754944e-38, %v648
  %v650 = vsel %vm647, %v649, %v645
  %v651 = vmul.f32 %v393, %v650
  %v652 = vrcp.pop %v470
  %v653 = vmul.f32 %v470, %v652
  %v654 = vsub.f32 1.0, %v653
  %v655 = vmul.f32 %v652, %v654
  %v656 = vadd.f32 %v652, %v655
  %vm657 = vweird.f32 %v470
  %vm658 = vweird.f32 %v652
  %vm659 = vmor %vm657, %vm658
  %v660 = vsel %vm659, %v652, %v656
  %v661 = vand.u32 2147483647, %v470
  %vm662 = vcmp.eq.f32.partialorder %v661, 8.507059e+37
  %v663 = vand.u32 %v470, 2147483648
  %v664 = vor.u32 1.1754944e-38, %v663
  %v665 = vsel %vm662, %v664, %v660
  %v666 = vmul.f32 %v395, %v665
  %v667 = vrcp.pop %v477
  %v668 = vmul.f32 %v477, %v667
  %v669 = vsub.f32 1.0, %v668
  %v670 = vmul.f32 %v667, %v669
  %v671 = vadd.f32 %v667, %v670
  %vm672 = vweird.f32 %v477
  %vm673 = vweird.f32 %v667
  %vm674 = vmor %vm672, %vm673
  %v675 = vsel %vm674, %v667, %v671
  %v676 = vand.u32 2147483647, %v477
  %vm677 = vcmp.eq.f32.partialorder %v676, 8.507059e+37
  %v678 = vand.u32 %v477, 2147483648
  %v679 = vor.u32 1.1754944e-38, %v678
  %v680 = vsel %vm677, %v679, %v675
  %v681 = vmul.f32 %v397, %v680
  %v682 = vrcp.pop %v484
  %v683 = vmul.f32 %v484, %v682
  %v684 = vsub.f32 1.0, %v683
  %v685 = vmul.f32 %v682, %v684
  %v686 = vadd.f32 %v682, %v685
  %vm687 = vweird.f32 %v484
  %vm688 = vweird.f32 %v682
  %vm689 = vmor %vm687, %vm688
  %v690 = vsel %vm689, %v682, %v686
  %v691 = vand.u32 2147483647, %v484
  %vm692 = vcmp.eq.f32.partialorder %v691, 8.507059e+37
  %v693 = vand.u32 %v484, 2147483648
  %v694 = vor.u32 1.1754944e-38, %v693
  %v695 = vsel %vm692, %v694, %v690
  %v696 = vmul.f32 %v399, %v695
  %v697 = vrcp.pop %v491
  %v698 = vmul.f32 %v491, %v697
  %v699 = vsub.f32 1.0, %v698
  %v700 = vmul.f32 %v697, %v699
  %v701 = vadd.f32 %v697, %v700
  %vm702 = vweird.f32 %v491
  %vm703 = vweird.f32 %v697
  %vm704 = vmor %vm702, %vm703
  %v705 = vsel %vm704, %v697, %v701
  %v706 = vand.u32 2147483647, %v491
  %vm707 = vcmp.eq.f32.partialorder %v706, 8.507059e+37
  %v708 = vand.u32 %v491, 2147483648
  %v709 = vor.u32 1.1754944e-38, %v708
  %v710 = vsel %vm707, %v709, %v705
  %v711 = vmul.f32 %v401, %v710
  %v712 = vrcp.pop %v498
  %v713 = vmul.f32 %v498, %v712
  %v714 = vsub.f32 1.0, %v713
  %v715 = vmul.f32 %v712, %v714
  %v716 = vadd.f32 %v712, %v715
  %vm717 = vweird.f32 %v498
  %vm718 = vweird.f32 %v712
  %vm719 = vmor %vm717, %vm718
  %v720 = vsel %vm719, %v712, %v716
  %v721 = vand.u32 2147483647, %v498
  %vm722 = vcmp.eq.f32.partialorder %v721, 8.507059e+37
  %v723 = vand.u32 %v498, 2147483648
  %v724 = vor.u32 1.1754944e-38, %v723
  %v725 = vsel %vm722, %v724, %v720
  %v726 = vmul.f32 %v403, %v725
  %v727 = vrcp.pop %v505
  %v728 = vmul.f32 %v505, %v727
  %v729 = vsub.f32 1.0, %v728
  %v730 = vmul.f32 %v727, %v729
  %v731 = vadd.f32 %v727, %v730
  %vm732 = vweird.f32 %v505
  %vm733 = vweird.f32 %v727
  %vm734 = vmor %vm732, %vm733
  %v735 = vsel %vm734, %v727, %v731
  %v736 = vand.u32 2147483647, %v505
  %vm737 = vcmp.eq.f32.partialorder %v736, 8.507059e+37
  %v738 = vand.u32 %v505, 2147483648
  %v739 = vor.u32 1.1754944e-38, %v738
  %v740 = vsel %vm737, %v739, %v735
  %v741 = vmul.f32 %v405, %v740
  %v742 = vrcp.pop %v512
  %v743 = vmul.f32 %v512, %v742
  %v744 = vsub.f32 1.0, %v743
  %v745 = vmul.f32 %v742, %v744
  %v746 = vadd.f32 %v742, %v745
  %vm747 = vweird.f32 %v512
  %vm748 = vweird.f32 %v742
  %vm749 = vmor %vm747, %vm748
  %v750 = vsel %vm749, %v742, %v746
  %v751 = vand.u32 2147483647, %v512
  %vm752 = vcmp.eq.f32.partialorder %v751, 8.507059e+37
  %v753 = vand.u32 %v512, 2147483648
  %v754 = vor.u32 1.1754944e-38, %v753
  %v755 = vsel %vm752, %v754, %v750
  %v756 = vmul.f32 %v407, %v755
  %v757 = vrcp.pop %v519
  %v758 = vmul.f32 %v519, %v757
  %v759 = vsub.f32 1.0, %v758
  %v760 = vmul.f32 %v757, %v759
  %v761 = vadd.f32 %v757, %v760
  %vm762 = vweird.f32 %v519
  %vm763 = vweird.f32 %v757
  %vm764 = vmor %vm762, %vm763
  %v765 = vsel %vm764, %v757, %v761
  %v766 = vand.u32 2147483647, %v519
  %vm767 = vcmp.eq.f32.partialorder %v766, 8.507059e+37
  %v768 = vand.u32 %v519, 2147483648
  %v769 = vor.u32 1.1754944e-38, %v768
  %v770 = vsel %vm767, %v769, %v765
  %v771 = vmul.f32 %v409, %v770
  %v772 = vrcp.pop %v526
  %v773 = vmul.f32 %v526, %v772
  %v774 = vsub.f32 1.0, %v773
  %v775 = vmul.f32 %v772, %v774
  %v776 = vadd.f32 %v772, %v775
  %vm777 = vweird.f32 %v526
  %vm778 = vweird.f32 %v772
  %vm779 = vmor %vm777, %vm778
  %v780 = vsel %vm779, %v772, %v776
  %v781 = vand.u32 2147483647, %v526
  %vm782 = vcmp.eq.f32.partialorder %v781, 8.507059e+37
  %v783 = vand.u32 %v526, 2147483648
  %v784 = vor.u32 1.1754944e-38, %v783
  %v785 = vsel %vm782, %v784, %v780
  %v786 = vmul.f32 %v411, %v785
  %v787 = vrcp.pop %v533
  %v788 = vmul.f32 %v533, %v787
  %v789 = vsub.f32 1.0, %v788
  %v790 = vmul.f32 %v787, %v789
  %v791 = vadd.f32 %v787, %v790
  %vm792 = vweird.f32 %v533
  %vm793 = vweird.f32 %v787
  %vm794 = vmor %vm792, %vm793
  %v795 = vsel %vm794, %v787, %v791
  %v796 = vand.u32 2147483647, %v533
  %vm797 = vcmp.eq.f32.partialorder %v796, 8.507059e+37
  %v798 = vand.u32 %v533, 2147483648
  %v799 = vor.u32 1.1754944e-38, %v798
  %v800 = vsel %vm797, %v799, %v795
  %v801 = vmul.f32 %v413, %v800
  %v802 = vrcp.pop %v540
  %v803 = vmul.f32 %v540, %v802
  %v804 = vsub.f32 1.0, %v803
  %v805 = vmul.f32 %v802, %v804
  %v806 = vadd.f32 %v802, %v805
  %vm807 = vweird.f32 %v540
  %vm808 = vweird.f32 %v802
  %vm809 = vmor %vm807, %vm808
  %v810 = vsel %vm809, %v802, %v806
  %v811 = vand.u32 2147483647, %v540
  %vm812 = vcmp.eq.f32.partialorder %v811, 8.507059e+37
  %v813 = vand.u32 %v540, 2147483648
  %v814 = vor.u32 1.1754944e-38, %v813
  %v815 = vsel %vm812, %v814, %v810
  %v816 = vmul.f32 %v415, %v815
  %v817 = vrcp.pop %v547
  %v818 = vmul.f32 %v547, %v817
  %v819 = vsub.f32 1.0, %v818
  %v820 = vmul.f32 %v817, %v819
  %v821 = vadd.f32 %v817, %v820
  %vm822 = vweird.f32 %v547
  %vm823 = vweird.f32 %v817
  %vm824 = vmor %vm822, %vm823
  %v825 = vsel %vm824, %v817, %v821
  %v826 = vand.u32 2147483647, %v547
  %vm827 = vcmp.eq.f32.partialorder %v826, 8.507059e+37
  %v828 = vand.u32 %v547, 2147483648
  %v829 = vor.u32 1.1754944e-38, %v828
  %v830 = vsel %vm827, %v829, %v825
  %v831 = vmul.f32 %v417, %v830
  %v832 = vrcp.pop %v554
  %v833 = vmul.f32 %v554, %v832
  %v834 = vsub.f32 1.0, %v833
  %v835 = vmul.f32 %v832, %v834
  %v836 = vadd.f32 %v832, %v835
  %vm837 = vweird.f32 %v554
  %vm838 = vweird.f32 %v832
  %vm839 = vmor %vm837, %vm838
  %v840 = vsel %vm839, %v832, %v836
  %v841 = vand.u32 2147483647, %v554
  %vm842 = vcmp.eq.f32.partialorder %v841, 8.507059e+37
  %v843 = vand.u32 %v554, 2147483648
  %v844 = vor.u32 1.1754944e-38, %v843
  %v845 = vsel %vm842, %v844, %v840
  %v846 = vmul.f32 %v419, %v845
  %v847 = vrcp.pop %v561
  %v848 = vmul.f32 %v561, %v847
  %v849 = vsub.f32 1.0, %v848
  %v850 = vmul.f32 %v847, %v849
  %v851 = vadd.f32 %v847, %v850
  %vm852 = vweird.f32 %v561
  %vm853 = vweird.f32 %v847
  %vm854 = vmor %vm852, %vm853
  %v855 = vsel %vm854, %v847, %v851
  %v856 = vand.u32 2147483647, %v561
  %vm857 = vcmp.eq.f32.partialorder %v856, 8.507059e+37
  %v858 = vand.u32 %v561, 2147483648
  %v859 = vor.u32 1.1754944e-38, %v858
  %v860 = vsel %vm857, %v859, %v855
  %v861 = vmul.f32 %v421, %v860
  %v862 = vld [vmem:[%s1] sm:$0xf]
  %v863 = vld [vmem:[%s1 + $0x4] sm:$0xf]
  %v864 = vld [vmem:[%s1 + $0x8] sm:$0xf]
  %v865 = vld [vmem:[%s1 + $0xc] sm:$0xf]
  %v866 = vld [vmem:[%s1 + $0x10] sm:$0xf]
  %v867 = vld [vmem:[%s1 + $0x14] sm:$0xf]
  %v868 = vld [vmem:[%s1 + $0x18] sm:$0xf]
  %v869 = vld [vmem:[%s1 + $0x1c] sm:$0xf]
  %v870 = vld [vmem:[%s1 + $0x20] sm:$0xf]
  %v871 = vld [vmem:[%s1 + $0x24] sm:$0xf]
  %v872 = vld [vmem:[%s1 + $0x28] sm:$0xf]
  %v873 = vld [vmem:[%s1 + $0x2c] sm:$0xf]
  %v874 = vld [vmem:[%s1 + $0x30] sm:$0xf]
  %v875 = vld [vmem:[%s1 + $0x34] sm:$0xf]
  %v876 = vld [vmem:[%s1 + $0x38] sm:$0xf]
  %v877 = vld [vmem:[%s1 + $0x3c] sm:$0xf]
  %v878 = vld [vmem:[%s1 + $0x40] sm:$0xf]
  %v879 = vld [vmem:[%s1 + $0x44] sm:$0xf]
  %v880 = vld [vmem:[%s1 + $0x48] sm:$0xf]
  %v881 = vld [vmem:[%s1 + $0x4c] sm:$0xf]
  %883 = vset.pattern.permute.xlu0 0
  %884 = vperm.xlu0 %883, %v576
  %v885 = vpop.permute.xlu0 %884
  %v888 = vunpack.c.l.s4 839922192
  %v889 = vunpack.c.0.s8 %v888
  %v890 = vperm.slane %v885, %v889
  %892 = vset.pattern.permute.xlu0 0
  %893 = vperm.xlu0 %892, %v591
  %v894 = vpop.permute.xlu0 %893
  %v897 = vunpack.c.l.s4 839922192
  %v898 = vunpack.c.0.s8 %v897
  %v899 = vperm.slane %v894, %v898
  %901 = vset.pattern.permute.xlu0 0
  %902 = vperm.xlu0 %901, %v606
  %v903 = vpop.permute.xlu0 %902
  %v906 = vunpack.c.l.s4 839922192
  %v907 = vunpack.c.0.s8 %v906
  %v908 = vperm.slane %v903, %v907
  %910 = vset.pattern.permute.xlu0 0
  %911 = vperm.xlu0 %910, %v621
  %v912 = vpop.permute.xlu0 %911
  %v915 = vunpack.c.l.s4 839922192
  %v916 = vunpack.c.0.s8 %v915
  %v917 = vperm.slane %v912, %v916
  %919 = vset.pattern.permute.xlu0 0
  %920 = vperm.xlu0 %919, %v636
  %v921 = vpop.permute.xlu0 %920
  %v924 = vunpack.c.l.s4 839922192
  %v925 = vunpack.c.0.s8 %v924
  %v926 = vperm.slane %v921, %v925
  %928 = vset.pattern.permute.xlu0 0
  %929 = vperm.xlu0 %928, %v651
  %v930 = vpop.permute.xlu0 %929
  %v933 = vunpack.c.l.s4 839922192
  %v934 = vunpack.c.0.s8 %v933
  %v935 = vperm.slane %v930, %v934
  %937 = vset.pattern.permute.xlu0 0
  %938 = vperm.xlu0 %937, %v666
  %v939 = vpop.permute.xlu0 %938
  %v942 = vunpack.c.l.s4 839922192
  %v943 = vunpack.c.0.s8 %v942
  %v944 = vperm.slane %v939, %v943
  %946 = vset.pattern.permute.xlu0 0
  %947 = vperm.xlu0 %946, %v681
  %v948 = vpop.permute.xlu0 %947
  %v951 = vunpack.c.l.s4 839922192
  %v952 = vunpack.c.0.s8 %v951
  %v953 = vperm.slane %v948, %v952
  %955 = vset.pattern.permute.xlu0 0
  %956 = vperm.xlu0 %955, %v696
  %v957 = vpop.permute.xlu0 %956
  %v960 = vunpack.c.l.s4 839922192
  %v961 = vunpack.c.0.s8 %v960
  %v962 = vperm.slane %v957, %v961
  %964 = vset.pattern.permute.xlu0 0
  %965 = vperm.xlu0 %964, %v711
  %v966 = vpop.permute.xlu0 %965
  %v969 = vunpack.c.l.s4 839922192
  %v970 = vunpack.c.0.s8 %v969
  %v971 = vperm.slane %v966, %v970
  %973 = vset.pattern.permute.xlu0 0
  %974 = vperm.xlu0 %973, %v726
  %v975 = vpop.permute.xlu0 %974
  %v978 = vunpack.c.l.s4 839922192
  %v979 = vunpack.c.0.s8 %v978
  %v980 = vperm.slane %v975, %v979
  %982 = vset.pattern.permute.xlu0 0
  %983 = vperm.xlu0 %982, %v741
  %v984 = vpop.permute.xlu0 %983
  %v987 = vunpack.c.l.s4 839922192
  %v988 = vunpack.c.0.s8 %v987
  %v989 = vperm.slane %v984, %v988
  %991 = vset.pattern.permute.xlu0 0
  %992 = vperm.xlu0 %991, %v756
  %v993 = vpop.permute.xlu0 %992
  %v996 = vunpack.c.l.s4 839922192
  %v997 = vunpack.c.0.s8 %v996
  %v998 = vperm.slane %v993, %v997
  %1000 = vset.pattern.permute.xlu0 0
  %1001 = vperm.xlu0 %1000, %v771
  %v1002 = vpop.permute.xlu0 %1001
  %v1005 = vunpack.c.l.s4 839922192
  %v1006 = vunpack.c.0.s8 %v1005
  %v1007 = vperm.slane %v1002, %v1006
  %1009 = vset.pattern.permute.xlu0 0
  %1010 = vperm.xlu0 %1009, %v786
  %v1011 = vpop.permute.xlu0 %1010
  %v1014 = vunpack.c.l.s4 839922192
  %v1015 = vunpack.c.0.s8 %v1014
  %v1016 = vperm.slane %v1011, %v1015
  %1018 = vset.pattern.permute.xlu0 0
  %1019 = vperm.xlu0 %1018, %v801
  %v1020 = vpop.permute.xlu0 %1019
  %v1023 = vunpack.c.l.s4 839922192
  %v1024 = vunpack.c.0.s8 %v1023
  %v1025 = vperm.slane %v1020, %v1024
  %1027 = vset.pattern.permute.xlu0 0
  %1028 = vperm.xlu0 %1027, %v816
  %v1029 = vpop.permute.xlu0 %1028
  %v1032 = vunpack.c.l.s4 839922192
  %v1033 = vunpack.c.0.s8 %v1032
  %v1034 = vperm.slane %v1029, %v1033
  %1036 = vset.pattern.permute.xlu0 0
  %1037 = vperm.xlu0 %1036, %v831
  %v1038 = vpop.permute.xlu0 %1037
  %v1041 = vunpack.c.l.s4 839922192
  %v1042 = vunpack.c.0.s8 %v1041
  %v1043 = vperm.slane %v1038, %v1042
  %1045 = vset.pattern.permute.xlu0 0
  %1046 = vperm.xlu0 %1045, %v846
  %v1047 = vpop.permute.xlu0 %1046
  %v1050 = vunpack.c.l.s4 839922192
  %v1051 = vunpack.c.0.s8 %v1050
  %v1052 = vperm.slane %v1047, %v1051
  %1054 = vset.pattern.permute.xlu0 0
  %1055 = vperm.xlu0 %1054, %v861
  %v1056 = vpop.permute.xlu0 %1055
  %v1059 = vunpack.c.l.s4 839922192
  %v1060 = vunpack.c.0.s8 %v1059
  %v1061 = vperm.slane %v1056, %v1060
  %v1062 = vmul.f32 %v890, %v862
  %v1063 = vmul.f32 %v899, %v863
  %v1064 = vmul.f32 %v908, %v864
  %v1065 = vmul.f32 %v917, %v865
  %v1066 = vmul.f32 %v926, %v866
  %v1067 = vmul.f32 %v935, %v867
  %v1068 = vmul.f32 %v944, %v868
  %v1069 = vmul.f32 %v953, %v869
  %v1070 = vmul.f32 %v962, %v870
  %v1071 = vmul.f32 %v971, %v871
  %v1072 = vmul.f32 %v980, %v872
  %v1073 = vmul.f32 %v989, %v873
  %v1074 = vmul.f32 %v998, %v874
  %v1075 = vmul.f32 %v1007, %v875
  %v1076 = vmul.f32 %v1016, %v876
  %v1077 = vmul.f32 %v1025, %v877
  %v1078 = vmul.f32 %v1034, %v878
  %v1079 = vmul.f32 %v1043, %v879
  %v1080 = vmul.f32 %v1052, %v880
  %v1081 = vmul.f32 %v1061, %v881
  %vm1082 = vcmask 257024
  %v1083 = vsel %vm1082, %v1062, 0.0
  %v1084 = vrot.slane %v1083, 4
  %v1085 = vadd.f32 %v1083, %v1084
  %v1086 = vrot.slane %v1085, 2
  %v1087 = vadd.f32 %v1085, %v1086
  %v1088 = vrot.slane %v1087, 1
  %v1089 = vadd.f32 %v1087, %v1088
  %v1090 = vsel %vm1082, %v1063, 0.0
  %v1091 = vrot.slane %v1090, 4
  %v1092 = vadd.f32 %v1090, %v1091
  %v1093 = vrot.slane %v1092, 2
  %v1094 = vadd.f32 %v1092, %v1093
  %v1095 = vrot.slane %v1094, 1
  %v1096 = vadd.f32 %v1094, %v1095
  %v1097 = vsel %vm1082, %v1064, 0.0
  %v1098 = vrot.slane %v1097, 4
  %v1099 = vadd.f32 %v1097, %v1098
  %v1100 = vrot.slane %v1099, 2
  %v1101 = vadd.f32 %v1099, %v1100
  %v1102 = vrot.slane %v1101, 1
  %v1103 = vadd.f32 %v1101, %v1102
  %v1104 = vsel %vm1082, %v1065, 0.0
  %v1105 = vrot.slane %v1104, 4
  %v1106 = vadd.f32 %v1104, %v1105
  %v1107 = vrot.slane %v1106, 2
  %v1108 = vadd.f32 %v1106, %v1107
  %v1109 = vrot.slane %v1108, 1
  %v1110 = vadd.f32 %v1108, %v1109
  %v1111 = vsel %vm1082, %v1066, 0.0
  %v1112 = vrot.slane %v1111, 4
  %v1113 = vadd.f32 %v1111, %v1112
  %v1114 = vrot.slane %v1113, 2
  %v1115 = vadd.f32 %v1113, %v1114
  %v1116 = vrot.slane %v1115, 1
  %v1117 = vadd.f32 %v1115, %v1116
  %v1118 = vsel %vm1082, %v1067, 0.0
  %v1119 = vrot.slane %v1118, 4
  %v1120 = vadd.f32 %v1118, %v1119
  %v1121 = vrot.slane %v1120, 2
  %v1122 = vadd.f32 %v1120, %v1121
  %v1123 = vrot.slane %v1122, 1
  %v1124 = vadd.f32 %v1122, %v1123
  %v1125 = vsel %vm1082, %v1068, 0.0
  %v1126 = vrot.slane %v1125, 4
  %v1127 = vadd.f32 %v1125, %v1126
  %v1128 = vrot.slane %v1127, 2
  %v1129 = vadd.f32 %v1127, %v1128
  %v1130 = vrot.slane %v1129, 1
  %v1131 = vadd.f32 %v1129, %v1130
  %v1132 = vsel %vm1082, %v1069, 0.0
  %v1133 = vrot.slane %v1132, 4
  %v1134 = vadd.f32 %v1132, %v1133
  %v1135 = vrot.slane %v1134, 2
  %v1136 = vadd.f32 %v1134, %v1135
  %v1137 = vrot.slane %v1136, 1
  %v1138 = vadd.f32 %v1136, %v1137
  %v1139 = vsel %vm1082, %v1070, 0.0
  %v1140 = vrot.slane %v1139, 4
  %v1141 = vadd.f32 %v1139, %v1140
  %v1142 = vrot.slane %v1141, 2
  %v1143 = vadd.f32 %v1141, %v1142
  %v1144 = vrot.slane %v1143, 1
  %v1145 = vadd.f32 %v1143, %v1144
  %v1146 = vsel %vm1082, %v1071, 0.0
  %v1147 = vrot.slane %v1146, 4
  %v1148 = vadd.f32 %v1146, %v1147
  %v1149 = vrot.slane %v1148, 2
  %v1150 = vadd.f32 %v1148, %v1149
  %v1151 = vrot.slane %v1150, 1
  %v1152 = vadd.f32 %v1150, %v1151
  %v1153 = vsel %vm1082, %v1072, 0.0
  %v1154 = vrot.slane %v1153, 4
  %v1155 = vadd.f32 %v1153, %v1154
  %v1156 = vrot.slane %v1155, 2
  %v1157 = vadd.f32 %v1155, %v1156
  %v1158 = vrot.slane %v1157, 1
  %v1159 = vadd.f32 %v1157, %v1158
  %v1160 = vsel %vm1082, %v1073, 0.0
  %v1161 = vrot.slane %v1160, 4
  %v1162 = vadd.f32 %v1160, %v1161
  %v1163 = vrot.slane %v1162, 2
  %v1164 = vadd.f32 %v1162, %v1163
  %v1165 = vrot.slane %v1164, 1
  %v1166 = vadd.f32 %v1164, %v1165
  %v1167 = vsel %vm1082, %v1074, 0.0
  %v1168 = vrot.slane %v1167, 4
  %v1169 = vadd.f32 %v1167, %v1168
  %v1170 = vrot.slane %v1169, 2
  %v1171 = vadd.f32 %v1169, %v1170
  %v1172 = vrot.slane %v1171, 1
  %v1173 = vadd.f32 %v1171, %v1172
  %v1174 = vsel %vm1082, %v1075, 0.0
  %v1175 = vrot.slane %v1174, 4
  %v1176 = vadd.f32 %v1174, %v1175
  %v1177 = vrot.slane %v1176, 2
  %v1178 = vadd.f32 %v1176, %v1177
  %v1179 = vrot.slane %v1178, 1
  %v1180 = vadd.f32 %v1178, %v1179
  %v1181 = vsel %vm1082, %v1076, 0.0
  %v1182 = vrot.slane %v1181, 4
  %v1183 = vadd.f32 %v1181, %v1182
  %v1184 = vrot.slane %v1183, 2
  %v1185 = vadd.f32 %v1183, %v1184
  %v1186 = vrot.slane %v1185, 1
  %v1187 = vadd.f32 %v1185, %v1186
  %v1188 = vsel %vm1082, %v1077, 0.0
  %v1189 = vrot.slane %v1188, 4
  %v1190 = vadd.f32 %v1188, %v1189
  %v1191 = vrot.slane %v1190, 2
  %v1192 = vadd.f32 %v1190, %v1191
  %v1193 = vrot.slane %v1192, 1
  %v1194 = vadd.f32 %v1192, %v1193
  %v1195 = vsel %vm1082, %v1078, 0.0
  %v1196 = vrot.slane %v1195, 4
  %v1197 = vadd.f32 %v1195, %v1196
  %v1198 = vrot.slane %v1197, 2
  %v1199 = vadd.f32 %v1197, %v1198
  %v1200 = vrot.slane %v1199, 1
  %v1201 = vadd.f32 %v1199, %v1200
  %v1202 = vsel %vm1082, %v1079, 0.0
  %v1203 = vrot.slane %v1202, 4
  %v1204 = vadd.f32 %v1202, %v1203
  %v1205 = vrot.slane %v1204, 2
  %v1206 = vadd.f32 %v1204, %v1205
  %v1207 = vrot.slane %v1206, 1
  %v1208 = vadd.f32 %v1206, %v1207
  %v1209 = vsel %vm1082, %v1080, 0.0
  %v1210 = vrot.slane %v1209, 4
  %v1211 = vadd.f32 %v1209, %v1210
  %v1212 = vrot.slane %v1211, 2
  %v1213 = vadd.f32 %v1211, %v1212
  %v1214 = vrot.slane %v1213, 1
  %v1215 = vadd.f32 %v1213, %v1214
  %v1216 = vsel %vm1082, %v1081, 0.0
  %v1217 = vrot.slane %v1216, 4
  %v1218 = vadd.f32 %v1216, %v1217
  %v1219 = vrot.slane %v1218, 2
  %v1220 = vadd.f32 %v1218, %v1219
  %v1221 = vrot.slane %v1220, 1
  %v1222 = vadd.f32 %v1220, %v1221
  %v1223 = vld [vmem:[%s0] sm:$0x1f]
  %v1224 = vld [vmem:[%s0 + $0x8] sm:$0x1f]
  %v1225 = vld [vmem:[%s0 + $0x10] sm:$0x1f]
  %v1226 = vld [vmem:[%s0 + $0x18] sm:$0x1f]
  %vm1247 = vcmask 1041409
  %v1248 = vsel %vm1247, %v1096, %v1089
  %vm1249 = vcmask 1042434
  %v1250 = vsel %vm1249, %v1103, %v1248
  %vm1251 = vcmask 1043459
  %v1252 = vsel %vm1251, %v1110, %v1250
  %vm1253 = vcmask 1044484
  %v1254 = vsel %vm1253, %v1117, %v1252
  %v1255 = vsel %vm1247, %v1131, %v1124
  %v1256 = vsel %vm1249, %v1138, %v1255
  %v1257 = vsel %vm1251, %v1145, %v1256
  %v1258 = vsel %vm1253, %v1152, %v1257
  %v1259 = vsel %vm1247, %v1166, %v1159
  %v1260 = vsel %vm1249, %v1173, %v1259
  %v1261 = vsel %vm1251, %v1180, %v1260
  %v1262 = vsel %vm1253, %v1187, %v1261
  %v1263 = vsel %vm1247, %v1201, %v1194
  %v1264 = vsel %vm1249, %v1208, %v1263
  %v1265 = vsel %vm1251, %v1215, %v1264
  %v1266 = vsel %vm1253, %v1222, %v1265
  %v1271 = vadd.f32 %v1223, %v1254
  %v1272 = vadd.f32 %v1224, %v1258
  %v1273 = vadd.f32 %v1225, %v1262
  %v1274 = vadd.f32 %v1226, %v1266
  %v1279 = vrot.slane %v1271, 1
  %v1280 = vrot.slane %v1271, 2
  %v1281 = vrot.slane %v1271, 3
  %v1282 = vrot.slane %v1271, 4
  %v1283 = vrot.slane %v1272, 1
  %v1284 = vrot.slane %v1272, 2
  %v1285 = vrot.slane %v1272, 3
  %v1286 = vrot.slane %v1272, 4
  %v1287 = vrot.slane %v1273, 1
  %v1288 = vrot.slane %v1273, 2
  %v1289 = vrot.slane %v1273, 3
  %v1290 = vrot.slane %v1273, 4
  %v1291 = vrot.slane %v1274, 1
  %v1292 = vrot.slane %v1274, 2
  %v1293 = vrot.slane %v1274, 3
  %v1294 = vrot.slane %v1274, 4
  %1295 = vst [vmem:[#allocation1] ss:$9 sm:$0xff] %v1271
  %s1296 = scalar_lea.vmem [#allocation1], 1
  %1297 = vst [vmem:[%s1296] ss:$9 sm:$0xff] %v1279
  %s1298 = scalar_lea.vmem [#allocation1], 2
  %1299 = vst [vmem:[%s1298] ss:$9 sm:$0xff] %v1280
  %s1300 = scalar_lea.vmem [#allocation1], 3
  %1301 = vst [vmem:[%s1300] ss:$9 sm:$0xff] %v1281
  %s1302 = scalar_lea.vmem [#allocation1], 4
  %1303 = vst [vmem:[%s1302] ss:$9 sm:$0xff] %v1282
  %s1304 = scalar_lea.vmem [#allocation1], 5
  %1305 = vst [vmem:[%s1304] ss:$9 sm:$0xff] %v1272
  %s1306 = scalar_lea.vmem [#allocation1], 6
  %1307 = vst [vmem:[%s1306] ss:$9 sm:$0xff] %v1283
  %s1308 = scalar_lea.vmem [#allocation1], 7
  %1309 = vst [vmem:[%s1308] ss:$9 sm:$0xff] %v1284
  %v1310 = vld [vmem:[#allocation1] sm:$0xff]
  %1311 = vst [vmem:[#allocation1] ss:$9 sm:$0xff] %v1285
  %1312 = vst [vmem:[%s1296] ss:$9 sm:$0xff] %v1286
  %1313 = vst [vmem:[%s1298] ss:$9 sm:$0xff] %v1273
  %1314 = vst [vmem:[%s1300] ss:$9 sm:$0xff] %v1287
  %1315 = vst [vmem:[%s1302] ss:$9 sm:$0xff] %v1288
  %1316 = vst [vmem:[%s1304] ss:$9 sm:$0xff] %v1289
  %1317 = vst [vmem:[%s1306] ss:$9 sm:$0xff] %v1290
  %1318 = vst [vmem:[%s1308] ss:$9 sm:$0xff] %v1274
  %v1319 = vld [vmem:[#allocation1] sm:$0xff]
  %1320 = vst [vmem:[#allocation1] ss:$9 sm:$0xff] %v1291
  %1321 = vst [vmem:[%s1296] ss:$9 sm:$0xff] %v1292
  %1322 = vst [vmem:[%s1298] ss:$9 sm:$0xff] %v1293
  %1323 = vst [vmem:[%s1300] ss:$9 sm:$0xff] %v1294
  %v1324 = vld [vmem:[#allocation1] sm:$0xff]
  %v1328 = vpack.c.bf16 %v1319, %v1310
  %v1329 = vpack.c.bf16 %v1324, %v1324
  %v1330 = vld [vmem:[%s4] sm:$0xff]
  %v1331 = vld [vmem:[%s4 + $0x8] sm:$0xff]
  %v1332 = vld [vmem:[%s4 + $0x10] sm:$0xff]
  %v1333 = vld [vmem:[%s4 + $0x18] sm:$0xff]
  %v1334 = vpack.c.bf16 %v1331, %v1330
  %v1335 = vpack.c.bf16 %v1333, %v1332
  %v1336 = vld [vmem:[%s5] sm:$0x1]
  %v1338 = vperm.slane %v1336, 0
  %v1341 = vsel %vm64, %v1328, 0
  %v1344 = vsel %vm64, %v1329, 0
  %1346 = vmatpush.bf16.msra.mxu0 0
  %1347 = vmatpush.bf16.msra.mxu0 0
  %1348 = vmatpush.bf16.msra.mxu0 0
  %1349 = vmatpush.bf16.msra.mxu0 0
  %1350 = vmatpush.bf16.msra.mxu0 0
  %1351 = vmatpush.bf16.msra.mxu0 0
  %1352 = vmatpush.bf16.msra.mxu0 %v1335
  %1353 = vmatpush.bf16.msra.mxu0 %v1334
  %1354 = vmatmul.bf16.gmra.mxu0 %v1341
  %v1355 = vpop.f32.mrf.mxu0
  %v1356 = vadd.f32 %v1338, %v1355
  %v1357 = vpop.f32.mrf.mxu0
  %v1358 = vadd.f32 %v1338, %v1357
  %1359 = vmatmul.bf16.gmra.mxu0 %v1344
  %v1360 = vpop.f32.mrf.mxu0
  %v1361 = vadd.f32 %v1338, %v1360
  %v1362 = vpop.f32.mrf.mxu0
  %1363 = vdwg.mxu0
  %v1367 = vrot.slane %v1356, 1
  %v1368 = vrot.slane %v1356, 2
  %v1369 = vrot.slane %v1356, 3
  %v1370 = vrot.slane %v1356, 4
  %v1371 = vrot.slane %v1356, 5
  %v1372 = vrot.slane %v1356, 6
  %v1373 = vrot.slane %v1356, 7
  %v1374 = vrot.slane %v1358, 1
  %v1375 = vrot.slane %v1358, 2
  %v1376 = vrot.slane %v1358, 3
  %v1377 = vrot.slane %v1358, 4
  %v1378 = vrot.slane %v1358, 5
  %v1379 = vrot.slane %v1358, 6
  %v1380 = vrot.slane %v1358, 7
  %v1381 = vrot.slane %v1361, 1
  %v1382 = vrot.slane %v1361, 2
  %v1383 = vrot.slane %v1361, 3
  %v1401 = vxor.u32 %v1356, 2147483648
  %v1402 = vxor.u32 %v1367, 2147483648
  %v1403 = vxor.u32 %v1368, 2147483648
  %v1404 = vxor.u32 %v1369, 2147483648
  %v1405 = vxor.u32 %v1370, 2147483648
  %v1406 = vxor.u32 %v1371, 2147483648
  %v1407 = vxor.u32 %v1372, 2147483648
  %v1408 = vxor.u32 %v1373, 2147483648
  %v1409 = vxor.u32 %v1358, 2147483648
  %v1410 = vxor.u32 %v1374, 2147483648
  %v1411 = vxor.u32 %v1375, 2147483648
  %v1412 = vxor.u32 %v1376, 2147483648
  %v1413 = vxor.u32 %v1377, 2147483648
  %v1414 = vxor.u32 %v1378, 2147483648
  %v1415 = vxor.u32 %v1379, 2147483648
  %v1416 = vxor.u32 %v1380, 2147483648
  %v1417 = vxor.u32 %v1361, 2147483648
  %v1418 = vxor.u32 %v1381, 2147483648
  %v1419 = vxor.u32 %v1382, 2147483648
  %v1420 = vxor.u32 %v1383, 2147483648
  %v1421 = vmul.f32 %v1401, 1.442695
  %v1422 = vpow.pop %v1421
  %v1423 = vmul.f32 %v1402, 1.442695
  %v1424 = vpow.pop %v1423
  %v1425 = vmul.f32 %v1403, 1.442695
  %v1426 = vpow.pop %v1425
  %v1427 = vmul.f32 %v1404, 1.442695
  %v1428 = vpow.pop %v1427
  %v1429 = vmul.f32 %v1405, 1.442695
  %v1430 = vpow.pop %v1429
  %v1431 = vmul.f32 %v1406, 1.442695
  %v1432 = vpow.pop %v1431
  %v1433 = vmul.f32 %v1407, 1.442695
  %v1434 = vpow.pop %v1433
  %v1435 = vmul.f32 %v1408, 1.442695
  %v1436 = vpow.pop %v1435
  %v1437 = vmul.f32 %v1409, 1.442695
  %v1438 = vpow.pop %v1437
  %v1439 = vmul.f32 %v1410, 1.442695
  %v1440 = vpow.pop %v1439
  %v1441 = vmul.f32 %v1411, 1.442695
  %v1442 = vpow.pop %v1441
  %v1443 = vmul.f32 %v1412, 1.442695
  %v1444 = vpow.pop %v1443
  %v1445 = vmul.f32 %v1413, 1.442695
  %v1446 = vpow.pop %v1445
  %v1447 = vmul.f32 %v1414, 1.442695
  %v1448 = vpow.pop %v1447
  %v1449 = vmul.f32 %v1415, 1.442695
  %v1450 = vpow.pop %v1449
  %v1451 = vmul.f32 %v1416, 1.442695
  %v1452 = vpow.pop %v1451
  %v1453 = vmul.f32 %v1417, 1.442695
  %v1454 = vpow.pop %v1453
  %v1455 = vmul.f32 %v1418, 1.442695
  %v1456 = vpow.pop %v1455
  %v1457 = vmul.f32 %v1419, 1.442695
  %v1458 = vpow.pop %v1457
  %v1459 = vmul.f32 %v1420, 1.442695
  %v1460 = vpow.pop %v1459
  %v1461 = vadd.f32 %v1422, 1.0
  %v1462 = vadd.f32 %v1424, 1.0
  %v1463 = vadd.f32 %v1426, 1.0
  %v1464 = vadd.f32 %v1428, 1.0
  %v1465 = vadd.f32 %v1430, 1.0
  %v1466 = vadd.f32 %v1432, 1.0
  %v1467 = vadd.f32 %v1434, 1.0
  %v1468 = vadd.f32 %v1436, 1.0
  %v1469 = vadd.f32 %v1438, 1.0
  %v1470 = vadd.f32 %v1440, 1.0
  %v1471 = vadd.f32 %v1442, 1.0
  %v1472 = vadd.f32 %v1444, 1.0
  %v1473 = vadd.f32 %v1446, 1.0
  %v1474 = vadd.f32 %v1448, 1.0
  %v1475 = vadd.f32 %v1450, 1.0
  %v1476 = vadd.f32 %v1452, 1.0
  %v1477 = vadd.f32 %v1454, 1.0
  %v1478 = vadd.f32 %v1456, 1.0
  %v1479 = vadd.f32 %v1458, 1.0
  %v1480 = vadd.f32 %v1460, 1.0
  %v1481 = vrcp.pop %v1461
  %v1482 = vmul.f32 %v1461, %v1481
  %v1483 = vsub.f32 1.0, %v1482
  %v1484 = vmul.f32 %v1481, %v1483
  %v1485 = vadd.f32 %v1481, %v1484
  %vm1486 = vweird.f32 %v1461
  %vm1487 = vweird.f32 %v1481
  %vm1488 = vmor %vm1486, %vm1487
  %v1489 = vsel %vm1488, %v1481, %v1485
  %v1490 = vand.u32 2147483647, %v1461
  %vm1491 = vcmp.eq.f32.partialorder %v1490, 8.507059e+37
  %v1492 = vand.u32 %v1461, 2147483648
  %v1493 = vor.u32 1.1754944e-38, %v1492
  %v1494 = vsel %vm1491, %v1493, %v1489
  %v1495 = vmul.f32 1.0, %v1494
  %v1496 = vrcp.pop %v1462
  %v1497 = vmul.f32 %v1462, %v1496
  %v1498 = vsub.f32 1.0, %v1497
  %v1499 = vmul.f32 %v1496, %v1498
  %v1500 = vadd.f32 %v1496, %v1499
  %vm1501 = vweird.f32 %v1462
  %vm1502 = vweird.f32 %v1496
  %vm1503 = vmor %vm1501, %vm1502
  %v1504 = vsel %vm1503, %v1496, %v1500
  %v1505 = vand.u32 2147483647, %v1462
  %vm1506 = vcmp.eq.f32.partialorder %v1505, 8.507059e+37
  %v1507 = vand.u32 %v1462, 2147483648
  %v1508 = vor.u32 1.1754944e-38, %v1507
  %v1509 = vsel %vm1506, %v1508, %v1504
  %v1510 = vmul.f32 1.0, %v1509
  %v1511 = vrcp.pop %v1463
  %v1512 = vmul.f32 %v1463, %v1511
  %v1513 = vsub.f32 1.0, %v1512
  %v1514 = vmul.f32 %v1511, %v1513
  %v1515 = vadd.f32 %v1511, %v1514
  %vm1516 = vweird.f32 %v1463
  %vm1517 = vweird.f32 %v1511
  %vm1518 = vmor %vm1516, %vm1517
  %v1519 = vsel %vm1518, %v1511, %v1515
  %v1520 = vand.u32 2147483647, %v1463
  %vm1521 = vcmp.eq.f32.partialorder %v1520, 8.507059e+37
  %v1522 = vand.u32 %v1463, 2147483648
  %v1523 = vor.u32 1.1754944e-38, %v1522
  %v1524 = vsel %vm1521, %v1523, %v1519
  %v1525 = vmul.f32 1.0, %v1524
  %v1526 = vrcp.pop %v1464
  %v1527 = vmul.f32 %v1464, %v1526
  %v1528 = vsub.f32 1.0, %v1527
  %v1529 = vmul.f32 %v1526, %v1528
  %v1530 = vadd.f32 %v1526, %v1529
  %vm1531 = vweird.f32 %v1464
  %vm1532 = vweird.f32 %v1526
  %vm1533 = vmor %vm1531, %vm1532
  %v1534 = vsel %vm1533, %v1526, %v1530
  %v1535 = vand.u32 2147483647, %v1464
  %vm1536 = vcmp.eq.f32.partialorder %v1535, 8.507059e+37
  %v1537 = vand.u32 %v1464, 2147483648
  %v1538 = vor.u32 1.1754944e-38, %v1537
  %v1539 = vsel %vm1536, %v1538, %v1534
  %v1540 = vmul.f32 1.0, %v1539
  %v1541 = vrcp.pop %v1465
  %v1542 = vmul.f32 %v1465, %v1541
  %v1543 = vsub.f32 1.0, %v1542
  %v1544 = vmul.f32 %v1541, %v1543
  %v1545 = vadd.f32 %v1541, %v1544
  %vm1546 = vweird.f32 %v1465
  %vm1547 = vweird.f32 %v1541
  %vm1548 = vmor %vm1546, %vm1547
  %v1549 = vsel %vm1548, %v1541, %v1545
  %v1550 = vand.u32 2147483647, %v1465
  %vm1551 = vcmp.eq.f32.partialorder %v1550, 8.507059e+37
  %v1552 = vand.u32 %v1465, 2147483648
  %v1553 = vor.u32 1.1754944e-38, %v1552
  %v1554 = vsel %vm1551, %v1553, %v1549
  %v1555 = vmul.f32 1.0, %v1554
  %v1556 = vrcp.pop %v1466
  %v1557 = vmul.f32 %v1466, %v1556
  %v1558 = vsub.f32 1.0, %v1557
  %v1559 = vmul.f32 %v1556, %v1558
  %v1560 = vadd.f32 %v1556, %v1559
  %vm1561 = vweird.f32 %v1466
  %vm1562 = vweird.f32 %v1556
  %vm1563 = vmor %vm1561, %vm1562
  %v1564 = vsel %vm1563, %v1556, %v1560
  %v1565 = vand.u32 2147483647, %v1466
  %vm1566 = vcmp.eq.f32.partialorder %v1565, 8.507059e+37
  %v1567 = vand.u32 %v1466, 2147483648
  %v1568 = vor.u32 1.1754944e-38, %v1567
  %v1569 = vsel %vm1566, %v1568, %v1564
  %v1570 = vmul.f32 1.0, %v1569
  %v1571 = vrcp.pop %v1467
  %v1572 = vmul.f32 %v1467, %v1571
  %v1573 = vsub.f32 1.0, %v1572
  %v1574 = vmul.f32 %v1571, %v1573
  %v1575 = vadd.f32 %v1571, %v1574
  %vm1576 = vweird.f32 %v1467
  %vm1577 = vweird.f32 %v1571
  %vm1578 = vmor %vm1576, %vm1577
  %v1579 = vsel %vm1578, %v1571, %v1575
  %v1580 = vand.u32 2147483647, %v1467
  %vm1581 = vcmp.eq.f32.partialorder %v1580, 8.507059e+37
  %v1582 = vand.u32 %v1467, 2147483648
  %v1583 = vor.u32 1.1754944e-38, %v1582
  %v1584 = vsel %vm1581, %v1583, %v1579
  %v1585 = vmul.f32 1.0, %v1584
  %v1586 = vrcp.pop %v1468
  %v1587 = vmul.f32 %v1468, %v1586
  %v1588 = vsub.f32 1.0, %v1587
  %v1589 = vmul.f32 %v1586, %v1588
  %v1590 = vadd.f32 %v1586, %v1589
  %vm1591 = vweird.f32 %v1468
  %vm1592 = vweird.f32 %v1586
  %vm1593 = vmor %vm1591, %vm1592
  %v1594 = vsel %vm1593, %v1586, %v1590
  %v1595 = vand.u32 2147483647, %v1468
  %vm1596 = vcmp.eq.f32.partialorder %v1595, 8.507059e+37
  %v1597 = vand.u32 %v1468, 2147483648
  %v1598 = vor.u32 1.1754944e-38, %v1597
  %v1599 = vsel %vm1596, %v1598, %v1594
  %v1600 = vmul.f32 1.0, %v1599
  %v1601 = vrcp.pop %v1469
  %v1602 = vmul.f32 %v1469, %v1601
  %v1603 = vsub.f32 1.0, %v1602
  %v1604 = vmul.f32 %v1601, %v1603
  %v1605 = vadd.f32 %v1601, %v1604
  %vm1606 = vweird.f32 %v1469
  %vm1607 = vweird.f32 %v1601
  %vm1608 = vmor %vm1606, %vm1607
  %v1609 = vsel %vm1608, %v1601, %v1605
  %v1610 = vand.u32 2147483647, %v1469
  %vm1611 = vcmp.eq.f32.partialorder %v1610, 8.507059e+37
  %v1612 = vand.u32 %v1469, 2147483648
  %v1613 = vor.u32 1.1754944e-38, %v1612
  %v1614 = vsel %vm1611, %v1613, %v1609
  %v1615 = vmul.f32 1.0, %v1614
  %v1616 = vrcp.pop %v1470
  %v1617 = vmul.f32 %v1470, %v1616
  %v1618 = vsub.f32 1.0, %v1617
  %v1619 = vmul.f32 %v1616, %v1618
  %v1620 = vadd.f32 %v1616, %v1619
  %vm1621 = vweird.f32 %v1470
  %vm1622 = vweird.f32 %v1616
  %vm1623 = vmor %vm1621, %vm1622
  %v1624 = vsel %vm1623, %v1616, %v1620
  %v1625 = vand.u32 2147483647, %v1470
  %vm1626 = vcmp.eq.f32.partialorder %v1625, 8.507059e+37
  %v1627 = vand.u32 %v1470, 2147483648
  %v1628 = vor.u32 1.1754944e-38, %v1627
  %v1629 = vsel %vm1626, %v1628, %v1624
  %v1630 = vmul.f32 1.0, %v1629
  %v1631 = vrcp.pop %v1471
  %v1632 = vmul.f32 %v1471, %v1631
  %v1633 = vsub.f32 1.0, %v1632
  %v1634 = vmul.f32 %v1631, %v1633
  %v1635 = vadd.f32 %v1631, %v1634
  %vm1636 = vweird.f32 %v1471
  %vm1637 = vweird.f32 %v1631
  %vm1638 = vmor %vm1636, %vm1637
  %v1639 = vsel %vm1638, %v1631, %v1635
  %v1640 = vand.u32 2147483647, %v1471
  %vm1641 = vcmp.eq.f32.partialorder %v1640, 8.507059e+37
  %v1642 = vand.u32 %v1471, 2147483648
  %v1643 = vor.u32 1.1754944e-38, %v1642
  %v1644 = vsel %vm1641, %v1643, %v1639
  %v1645 = vmul.f32 1.0, %v1644
  %v1646 = vrcp.pop %v1472
  %v1647 = vmul.f32 %v1472, %v1646
  %v1648 = vsub.f32 1.0, %v1647
  %v1649 = vmul.f32 %v1646, %v1648
  %v1650 = vadd.f32 %v1646, %v1649
  %vm1651 = vweird.f32 %v1472
  %vm1652 = vweird.f32 %v1646
  %vm1653 = vmor %vm1651, %vm1652
  %v1654 = vsel %vm1653, %v1646, %v1650
  %v1655 = vand.u32 2147483647, %v1472
  %vm1656 = vcmp.eq.f32.partialorder %v1655, 8.507059e+37
  %v1657 = vand.u32 %v1472, 2147483648
  %v1658 = vor.u32 1.1754944e-38, %v1657
  %v1659 = vsel %vm1656, %v1658, %v1654
  %v1660 = vmul.f32 1.0, %v1659
  %v1661 = vrcp.pop %v1473
  %v1662 = vmul.f32 %v1473, %v1661
  %v1663 = vsub.f32 1.0, %v1662
  %v1664 = vmul.f32 %v1661, %v1663
  %v1665 = vadd.f32 %v1661, %v1664
  %vm1666 = vweird.f32 %v1473
  %vm1667 = vweird.f32 %v1661
  %vm1668 = vmor %vm1666, %vm1667
  %v1669 = vsel %vm1668, %v1661, %v1665
  %v1670 = vand.u32 2147483647, %v1473
  %vm1671 = vcmp.eq.f32.partialorder %v1670, 8.507059e+37
  %v1672 = vand.u32 %v1473, 2147483648
  %v1673 = vor.u32 1.1754944e-38, %v1672
  %v1674 = vsel %vm1671, %v1673, %v1669
  %v1675 = vmul.f32 1.0, %v1674
  %v1676 = vrcp.pop %v1474
  %v1677 = vmul.f32 %v1474, %v1676
  %v1678 = vsub.f32 1.0, %v1677
  %v1679 = vmul.f32 %v1676, %v1678
  %v1680 = vadd.f32 %v1676, %v1679
  %vm1681 = vweird.f32 %v1474
  %vm1682 = vweird.f32 %v1676
  %vm1683 = vmor %vm1681, %vm1682
  %v1684 = vsel %vm1683, %v1676, %v1680
  %v1685 = vand.u32 2147483647, %v1474
  %vm1686 = vcmp.eq.f32.partialorder %v1685, 8.507059e+37
  %v1687 = vand.u32 %v1474, 2147483648
  %v1688 = vor.u32 1.1754944e-38, %v1687
  %v1689 = vsel %vm1686, %v1688, %v1684
  %v1690 = vmul.f32 1.0, %v1689
  %v1691 = vrcp.pop %v1475
  %v1692 = vmul.f32 %v1475, %v1691
  %v1693 = vsub.f32 1.0, %v1692
  %v1694 = vmul.f32 %v1691, %v1693
  %v1695 = vadd.f32 %v1691, %v1694
  %vm1696 = vweird.f32 %v1475
  %vm1697 = vweird.f32 %v1691
  %vm1698 = vmor %vm1696, %vm1697
  %v1699 = vsel %vm1698, %v1691, %v1695
  %v1700 = vand.u32 2147483647, %v1475
  %vm1701 = vcmp.eq.f32.partialorder %v1700, 8.507059e+37
  %v1702 = vand.u32 %v1475, 2147483648
  %v1703 = vor.u32 1.1754944e-38, %v1702
  %v1704 = vsel %vm1701, %v1703, %v1699
  %v1705 = vmul.f32 1.0, %v1704
  %v1706 = vrcp.pop %v1476
  %v1707 = vmul.f32 %v1476, %v1706
  %v1708 = vsub.f32 1.0, %v1707
  %v1709 = vmul.f32 %v1706, %v1708
  %v1710 = vadd.f32 %v1706, %v1709
  %vm1711 = vweird.f32 %v1476
  %vm1712 = vweird.f32 %v1706
  %vm1713 = vmor %vm1711, %vm1712
  %v1714 = vsel %vm1713, %v1706, %v1710
  %v1715 = vand.u32 2147483647, %v1476
  %vm1716 = vcmp.eq.f32.partialorder %v1715, 8.507059e+37
  %v1717 = vand.u32 %v1476, 2147483648
  %v1718 = vor.u32 1.1754944e-38, %v1717
  %v1719 = vsel %vm1716, %v1718, %v1714
  %v1720 = vmul.f32 1.0, %v1719
  %v1721 = vrcp.pop %v1477
  %v1722 = vmul.f32 %v1477, %v1721
  %v1723 = vsub.f32 1.0, %v1722
  %v1724 = vmul.f32 %v1721, %v1723
  %v1725 = vadd.f32 %v1721, %v1724
  %vm1726 = vweird.f32 %v1477
  %vm1727 = vweird.f32 %v1721
  %vm1728 = vmor %vm1726, %vm1727
  %v1729 = vsel %vm1728, %v1721, %v1725
  %v1730 = vand.u32 2147483647, %v1477
  %vm1731 = vcmp.eq.f32.partialorder %v1730, 8.507059e+37
  %v1732 = vand.u32 %v1477, 2147483648
  %v1733 = vor.u32 1.1754944e-38, %v1732
  %v1734 = vsel %vm1731, %v1733, %v1729
  %v1735 = vmul.f32 1.0, %v1734
  %v1736 = vrcp.pop %v1478
  %v1737 = vmul.f32 %v1478, %v1736
  %v1738 = vsub.f32 1.0, %v1737
  %v1739 = vmul.f32 %v1736, %v1738
  %v1740 = vadd.f32 %v1736, %v1739
  %vm1741 = vweird.f32 %v1478
  %vm1742 = vweird.f32 %v1736
  %vm1743 = vmor %vm1741, %vm1742
  %v1744 = vsel %vm1743, %v1736, %v1740
  %v1745 = vand.u32 2147483647, %v1478
  %vm1746 = vcmp.eq.f32.partialorder %v1745, 8.507059e+37
  %v1747 = vand.u32 %v1478, 2147483648
  %v1748 = vor.u32 1.1754944e-38, %v1747
  %v1749 = vsel %vm1746, %v1748, %v1744
  %v1750 = vmul.f32 1.0, %v1749
  %v1751 = vrcp.pop %v1479
  %v1752 = vmul.f32 %v1479, %v1751
  %v1753 = vsub.f32 1.0, %v1752
  %v1754 = vmul.f32 %v1751, %v1753
  %v1755 = vadd.f32 %v1751, %v1754
  %vm1756 = vweird.f32 %v1479
  %vm1757 = vweird.f32 %v1751
  %vm1758 = vmor %vm1756, %vm1757
  %v1759 = vsel %vm1758, %v1751, %v1755
  %v1760 = vand.u32 2147483647, %v1479
  %vm1761 = vcmp.eq.f32.partialorder %v1760, 8.507059e+37
  %v1762 = vand.u32 %v1479, 2147483648
  %v1763 = vor.u32 1.1754944e-38, %v1762
  %v1764 = vsel %vm1761, %v1763, %v1759
  %v1765 = vmul.f32 1.0, %v1764
  %v1766 = vrcp.pop %v1480
  %v1767 = vmul.f32 %v1480, %v1766
  %v1768 = vsub.f32 1.0, %v1767
  %v1769 = vmul.f32 %v1766, %v1768
  %v1770 = vadd.f32 %v1766, %v1769
  %vm1771 = vweird.f32 %v1480
  %vm1772 = vweird.f32 %v1766
  %vm1773 = vmor %vm1771, %vm1772
  %v1774 = vsel %vm1773, %v1766, %v1770
  %v1775 = vand.u32 2147483647, %v1480
  %vm1776 = vcmp.eq.f32.partialorder %v1775, 8.507059e+37
  %v1777 = vand.u32 %v1480, 2147483648
  %v1778 = vor.u32 1.1754944e-38, %v1777
  %v1779 = vsel %vm1776, %v1778, %v1774
  %v1780 = vmul.f32 1.0, %v1779
  %1801 = vst [vmem:[#allocation1] ss:$9 sm:$0xff] %v1495
  %s1802 = scalar_lea.vmem [#allocation1], 1
  %1803 = vst [vmem:[%s1802] ss:$9 sm:$0xff] %v1510
  %s1804 = scalar_lea.vmem [#allocation1], 2
  %1805 = vst [vmem:[%s1804] ss:$9 sm:$0xff] %v1525
  %s1806 = scalar_lea.vmem [#allocation1], 3
  %1807 = vst [vmem:[%s1806] ss:$9 sm:$0xff] %v1540
  %s1808 = scalar_lea.vmem [#allocation1], 4
  %1809 = vst [vmem:[%s1808] ss:$9 sm:$0xff] %v1555
  %v1810 = vld [vmem:[#allocation1] sm:$0xff]
  %1811 = vst [vmem:[#allocation1] ss:$9 sm:$0xff] %v1570
  %1812 = vst [vmem:[%s1802] ss:$9 sm:$0xff] %v1585
  %1813 = vst [vmem:[%s1804] ss:$9 sm:$0xff] %v1600
  %1814 = vst [vmem:[%s1806] ss:$9 sm:$0xff] %v1615
  %1815 = vst [vmem:[%s1808] ss:$9 sm:$0xff] %v1630
  %v1816 = vld [vmem:[#allocation1] sm:$0xff]
  %1817 = vst [vmem:[#allocation1] ss:$9 sm:$0xff] %v1645
  %1818 = vst [vmem:[%s1802] ss:$9 sm:$0xff] %v1660
  %1819 = vst [vmem:[%s1804] ss:$9 sm:$0xff] %v1675
  %1820 = vst [vmem:[%s1806] ss:$9 sm:$0xff] %v1690
  %1821 = vst [vmem:[%s1808] ss:$9 sm:$0xff] %v1705
  %v1822 = vld [vmem:[#allocation1] sm:$0xff]
  %1823 = vst [vmem:[#allocation1] ss:$9 sm:$0xff] %v1720
  %1824 = vst [vmem:[%s1802] ss:$9 sm:$0xff] %v1735
  %1825 = vst [vmem:[%s1804] ss:$9 sm:$0xff] %v1750
  %1826 = vst [vmem:[%s1806] ss:$9 sm:$0xff] %v1765
  %1827 = vst [vmem:[%s1808] ss:$9 sm:$0xff] %v1780
  %v1828 = vld [vmem:[#allocation1] sm:$0xff]
  %vm1833 = vcmask 258048
  %1834 = vst.msk [vmem:[%s6] sm:$0x1f] %vm1833, %v1810
  %1835 = vst.msk [vmem:[%s6 + $0x8] sm:$0x1f] %vm1833, %v1816
  %1836 = vst.msk [vmem:[%s6 + $0x10] sm:$0x1f] %vm1833, %v1822
  %1837 = vst.msk [vmem:[%s6 + $0x18] sm:$0x1f] %vm1833, %v1828
  // Predicated region
  $region26: #{kgcn_forward.2} parent=0 // pred_check
    _
  $region27: #{kgcn_forward.2} parent=0 // pred_check_branch
    %1839 = sbr.rel (0) target = $region29
  $region28: #{kgcn_forward.2} parent=0 // pred_region
    _
  $region29: #{kgcn_forward.2} parent=0 // pred_fallthru
    _
  // Predicated region
  $region30: #{kgcn_forward.2} parent=0 // pred_check
    _
  $region31: #{kgcn_forward.2} parent=0 // pred_check_branch
    %1841 = sbr.rel (0) target = $region33
  $region32: #{kgcn_forward.2} parent=0 // pred_region
    _
  $region33: #{kgcn_forward.2} parent=0 // pred_fallthru
    _

</llo_original>
